<compile_context>
chip_gen: v7x
topology: tpu7x:2x2x1
jax: 0.10.0
libtpu: 0.0.40
codegen_flags: <defaults>
</compile_context>

<pallas_src>
import functools
import math

import jax
import jax.numpy as jnp
from jax.experimental import pallas as pl
from jax.experimental.pallas import tpu as pltpu

jax.config.update("jax_default_matmul_precision", "highest")

_VMEM_LIMIT = 32 * 1024 * 1024
_NEG = float(jnp.finfo(jnp.float32).min)   # -inf padding for max-pool windows


def _round_up(x, m):
    return ((x + m - 1) // m) * m


# ---------------------------------------------------------------------------
# Wrapper-side tap extraction (layout plumbing, stays out of the kernels)
# ---------------------------------------------------------------------------
def _conv_taps(x, kernel_size, stride, dilation, pad_value):
    """x: (B, L, C) -> taps (K, B, L_out, C) for a 'same-style' padded 1D conv/pool."""
    B, L, C = x.shape
    pad = (kernel_size - 1) // 2 * dilation
    l_out = (L + 2 * pad - dilation * (kernel_size - 1) - 1) // stride + 1
    xp = jnp.pad(x, ((0, 0), (pad, pad), (0, 0)), constant_values=pad_value)
    taps = []
    for k in range(kernel_size):
        start = k * dilation
        taps.append(
            jax.lax.slice(xp, (0, start, 0),
                          (B, start + (l_out - 1) * stride + 1, C),
                          (1, stride, 1)))
    return jnp.stack(taps, axis=0)


# ---------------------------------------------------------------------------
# Generic fused (taps @ W + b) -> LeakyReLU -> BN affine -> (+res, ReLU) kernel
# ---------------------------------------------------------------------------
def _fused_mm_kernel(*refs, act_slope, has_residual, final_relu):
    if has_residual:
        x_ref, w_ref, b_ref, s_ref, t_ref, r_ref, o_ref = refs
    else:
        x_ref, w_ref, b_ref, s_ref, t_ref, o_ref = refs
        r_ref = None
    num_taps = x_ref.shape[0]
    acc = jnp.dot(x_ref[0], w_ref[0], preferred_element_type=jnp.float32)
    for k in range(1, num_taps):
        acc = acc + jnp.dot(x_ref[k], w_ref[k], preferred_element_type=jnp.float32)
    y = acc + b_ref[...]
    if act_slope is not None:
        y = jnp.where(y >= 0, y, jnp.float32(act_slope) * y)
    y = y * s_ref[...] + t_ref[...]
    if r_ref is not None:
        y = y + r_ref[...]
    if final_relu:
        y = jnp.maximum(y, jnp.float32(0.0))
    o_ref[...] = y.astype(o_ref.dtype)


def fused_matmul(x_taps, w, b, *, scale=None, shift=None, act_slope=None,
                 residual=None, final_relu=False):
    """x_taps: (K, M, Cin); w: (K, Cin, Cout); b: (Cout,).  Returns (M, Cout) f32."""
    K, M, Cin = x_taps.shape
    Cout = w.shape[2]
    if scale is None:
        scale = jnp.ones((Cout,), jnp.float32)
    if shift is None:
        shift = jnp.zeros((Cout,), jnp.float32)

    TM = min(256, _round_up(M, 8))
    M_pad = _round_up(M, TM)
    if M_pad != M:
        x_taps = jnp.pad(x_taps, ((0, 0), (0, M_pad - M), (0, 0)))
        if residual is not None:
            residual = jnp.pad(residual, ((0, M_pad - M), (0, 0)))

    b2 = b.reshape(1, Cout).astype(jnp.float32)
    s2 = scale.reshape(1, Cout).astype(jnp.float32)
    t2 = shift.reshape(1, Cout).astype(jnp.float32)

    in_specs = [
        pl.BlockSpec((K, TM, Cin), lambda m: (0, m, 0)),
        pl.BlockSpec((K, Cin, Cout), lambda m: (0, 0, 0)),
        pl.BlockSpec((1, Cout), lambda m: (0, 0)),
        pl.BlockSpec((1, Cout), lambda m: (0, 0)),
        pl.BlockSpec((1, Cout), lambda m: (0, 0)),
    ]
    args = [x_taps.astype(jnp.float32), w.astype(jnp.float32), b2, s2, t2]
    if residual is not None:
        in_specs.append(pl.BlockSpec((TM, Cout), lambda m: (m, 0)))
        args.append(residual.astype(jnp.float32))

    out = pl.pallas_call(
        functools.partial(_fused_mm_kernel, act_slope=act_slope,
                          has_residual=residual is not None, final_relu=final_relu),
        out_shape=jax.ShapeDtypeStruct((M_pad, Cout), jnp.float32),
        grid=(M_pad // TM,),
        in_specs=in_specs,
        out_specs=pl.BlockSpec((TM, Cout), lambda m: (m, 0)),
        compiler_params=pltpu.CompilerParams(
            dimension_semantics=("parallel",), vmem_limit_bytes=_VMEM_LIMIT),
    )(*args)
    return out[:M]


def conv_block(x, w, b, *, stride=1, dilation=1, act_slope=None, bn=None,
               residual=None, final_relu=False):
    """Conv1d(+LeakyReLU)(+BN)(+residual,ReLU) on channels-last x: (B, L, Cin)."""
    B, L, Cin = x.shape
    K = w.shape[0]
    taps = _conv_taps(x, K, stride, dilation, 0.0)           # (K, B, L_out, Cin)
    L_out = taps.shape[2]
    taps2 = taps.reshape(K, B * L_out, Cin)
    res2 = residual.reshape(B * L_out, -1) if residual is not None else None
    scale, shift = (bn if bn is not None else (None, None))
    y = fused_matmul(taps2, w, b, scale=scale, shift=shift, act_slope=act_slope,
                     residual=res2, final_relu=final_relu)
    return y.reshape(B, L_out, w.shape[2])


def res_bottleneck(x, p):
    out = conv_block(x, p["w1"], p["b1"], act_slope=0.2, bn=p["bn1"])
    out = conv_block(out, p["w2"], p["b2"], dilation=p["dilation"],
                     act_slope=0.2, bn=p["bn2"])
    out = conv_block(out, p["w3"], p["b3"], act_slope=0.2, bn=p["bn3"],
                     residual=x, final_relu=True)
    return out


# ---------------------------------------------------------------------------
# Downsample: concat([maxpool(k=3,s=2,p=1), conv(k=3,s=2,p=1)]) on the channel axis
# ---------------------------------------------------------------------------
def _downsample_kernel(ct_ref, mt_ref, w_ref, b_ref, o_ref):
    K = ct_ref.shape[0]
    mp = mt_ref[0]
    for k in range(1, K):
        mp = jnp.maximum(mp, mt_ref[k])
    acc = jnp.dot(ct_ref[0], w_ref[0], preferred_element_type=jnp.float32)
    for k in range(1, K):
        acc = acc + jnp.dot(ct_ref[k], w_ref[k], preferred_element_type=jnp.float32)
    conv = acc + b_ref[...]
    o_ref[...] = jnp.concatenate([mp.astype(jnp.float32), conv], axis=-1).astype(o_ref.dtype)


def downsample(x, p):
    B, L, C = x.shape
    ct = _conv_taps(x, 3, 2, 1, 0.0)       # conv taps (zero padded)
    mt = _conv_taps(x, 3, 2, 1, _NEG)      # max-pool taps (-inf padded)
    K, _, L_out, _ = ct.shape
    M = B * L_out
    ct2 = ct.reshape(K, M, C)
    mt2 = mt.reshape(K, M, C)
    TM = min(256, _round_up(M, 8))
    M_pad = _round_up(M, TM)
    if M_pad != M:
        ct2 = jnp.pad(ct2, ((0, 0), (0, M_pad - M), (0, 0)))
        mt2 = jnp.pad(mt2, ((0, 0), (0, M_pad - M), (0, 0)), constant_values=_NEG)
    b2 = p["b"].reshape(1, C).astype(jnp.float32)

    out = pl.pallas_call(
        _downsample_kernel,
        out_shape=jax.ShapeDtypeStruct((M_pad, 2 * C), jnp.float32),
        grid=(M_pad // TM,),
        in_specs=[pl.BlockSpec((K, TM, C), lambda m: (0, m, 0)),
                  pl.BlockSpec((K, TM, C), lambda m: (0, m, 0)),
                  pl.BlockSpec((K, C, C), lambda m: (0, 0, 0)),
                  pl.BlockSpec((1, C), lambda m: (0, 0))],
        out_specs=pl.BlockSpec((TM, 2 * C), lambda m: (m, 0)),
        compiler_params=pltpu.CompilerParams(
            dimension_semantics=("parallel",), vmem_limit_bytes=_VMEM_LIMIT),
    )(ct2.astype(jnp.float32), mt2.astype(jnp.float32), p["w"].astype(jnp.float32), b2)
    return out[:M].reshape(B, L_out, 2 * C)


# ---------------------------------------------------------------------------
# MSAttention core:  out = (q*scale) @ k^T @ v   (NO softmax -- matches the spec)
# ---------------------------------------------------------------------------
def _attn_kernel(q_ref, k_ref, v_ref, o_ref, *, scale):
    q = q_ref[...] * jnp.float32(scale)
    k = k_ref[...]
    v = v_ref[...]
    attn = jax.lax.dot_general(q, k, (((1,), (1,)), ((), ())),
                               preferred_element_type=jnp.float32)
    o = jnp.dot(attn, v, preferred_element_type=jnp.float32)
    o_ref[...] = o.astype(o_ref.dtype)


def attention_core(q, k, v, scale):
    BH, N, D = q.shape
    spec = pl.BlockSpec((None, N, D), lambda i: (i, 0, 0))
    return pl.pallas_call(
        functools.partial(_attn_kernel, scale=scale),
        out_shape=jax.ShapeDtypeStruct((BH, N, D), jnp.float32),
        grid=(BH,),
        in_specs=[spec, spec, spec],
        out_specs=pl.BlockSpec((None, N, D), lambda i: (i, 0, 0)),
        compiler_params=pltpu.CompilerParams(
            dimension_semantics=("parallel",), vmem_limit_bytes=_VMEM_LIMIT),
    )(q, k, v)


def ms_attention(x, p, num_heads):
    B, N, C = x.shape
    H = num_heads
    Dh = C // H
    scale = Dh ** (-0.5)
    x2 = x.reshape(B * N, C)
    q2 = fused_matmul(x2[None], p["wq"], p["bq"])            # (B*N, C)
    kv2 = fused_matmul(x2[None], p["wkv"], p["bkv"])         # (B*N, 2C)
    q = q2.reshape(B, N, H, Dh).transpose(0, 2, 1, 3).reshape(B * H, N, Dh)
    kv = kv2.reshape(B, N, 2, H, Dh)
    k = kv[:, :, 0].transpose(0, 2, 1, 3).reshape(B * H, N, Dh)
    v = kv[:, :, 1].transpose(0, 2, 1, 3).reshape(B * H, N, Dh)
    o = attention_core(q, k, v, scale)
    o = o.reshape(B, H, N, Dh).transpose(0, 2, 1, 3).reshape(B * N, C)
    o = fused_matmul(o[None], p["wproj"], p["bproj"])
    return o.reshape(B, N, C)


# ---------------------------------------------------------------------------
# Global average pool over the sequence axis (AdaptiveAvgPool1d(1))
# ---------------------------------------------------------------------------
def _gap_kernel(x_ref, o_ref):
    o_ref[...] = jnp.mean(x_ref[...], axis=0, keepdims=True).astype(o_ref.dtype)


def global_avg_pool(x):
    B, N, C = x.shape
    out = pl.pallas_call(
        _gap_kernel,
        out_shape=jax.ShapeDtypeStruct((B, 1, C), jnp.float32),
        grid=(B,),
        in_specs=[pl.BlockSpec((None, N, C), lambda b: (b, 0, 0))],
        out_specs=pl.BlockSpec((None, 1, C), lambda b: (b, 0, 0)),
        compiler_params=pltpu.CompilerParams(
            dimension_semantics=("parallel",), vmem_limit_bytes=_VMEM_LIMIT),
    )(x)
    return out[:, 0, :]


# ---------------------------------------------------------------------------
# Parameters / positional encoding
# ---------------------------------------------------------------------------
def abs_positional_encoding(max_len, num_hiddens):
    pos = jnp.arange(max_len, dtype=jnp.float32)[:, None]
    div = jnp.power(10000.0, jnp.arange(0, num_hiddens, 2, dtype=jnp.float32) / num_hiddens)
    X = pos / div
    P = jnp.zeros((max_len, num_hiddens), jnp.float32)
    P = P.at[:, 0::2].set(jnp.sin(X))
    P = P.at[:, 1::2].set(jnp.cos(X))
    return P


def init_params(key, dim, nclass, hidden_dims, mlp_hidden=256, max_len=1000):
    keys = iter(jax.random.split(key, 64))

    def convp(cin, cout, k):
        kw, kb = jax.random.split(next(keys))
        bound = 1.0 / math.sqrt(cin * k)
        return {"w": jax.random.uniform(kw, (k, cin, cout), jnp.float32, -bound, bound),
                "b": jax.random.uniform(kb, (cout,), jnp.float32, -bound, bound)}

    def bn_p(c, eps=1e-5):
        gamma = jnp.ones((c,), jnp.float32)
        beta = jnp.zeros((c,), jnp.float32)
        rmean = jnp.zeros((c,), jnp.float32)
        rvar = jnp.ones((c,), jnp.float32)
        scale = gamma / jnp.sqrt(rvar + eps)
        return (scale, beta - rmean * scale)

    def resp(cin, hid, k, dil):
        c1, c2, c3 = convp(cin, hid, 1), convp(hid, hid, k), convp(hid, cin, 1)
        return {"w1": c1["w"], "b1": c1["b"], "bn1": bn_p(hid),
                "w2": c2["w"], "b2": c2["b"], "bn2": bn_p(hid),
                "w3": c3["w"], "b3": c3["b"], "bn3": bn_p(cin),
                "dilation": dil}

    h0, h1, h2, h3 = hidden_dims[:4]
    p = {"init_conv": convp(dim, h0, 3),
         "block2": [resp(h0, h0 * 2, 7, 3) for _ in range(3)],
         "ds1": convp(h0, h0, 3),
         "block3": [resp(h1, h1 * 2, 3, 2), resp(h1, h1 * 2, 3, 2), resp(h1, h1 * 2, 3, 1)],
         "ds2": convp(h1, h1, 3),
         "block4": [resp(h2, h2 * 2, 3, 1) for _ in range(3)],
         "ds3": convp(h2, h2, 3),
         "pos": abs_positional_encoding(max_len, h3)}
    lq, lkv, lproj = convp(h3, h3, 1), convp(h3, 2 * h3, 1), convp(h3, h3, 1)
    p["attn"] = {"wq": lq["w"], "bq": lq["b"], "wkv": lkv["w"], "bkv": lkv["b"],
                 "wproj": lproj["w"], "bproj": lproj["b"]}
    p["mlp1"] = convp(h3, mlp_hidden, 1)
    p["mlp2"] = convp(mlp_hidden, nclass, 1)
    return p


# ---------------------------------------------------------------------------
# Full Convformer forward (Pallas path)
# ---------------------------------------------------------------------------
def convformer_forward(params, x_bcl, num_heads=8):
    x = jnp.transpose(x_bcl, (0, 2, 1)).astype(jnp.float32)   # (B, L, C) channels-last
    x = conv_block(x, params["init_conv"]["w"], params["init_conv"]["b"], stride=2)
    for blk in params["block2"]:
        x = res_bottleneck(x, blk)
    x = downsample(x, params["ds1"])
    for blk in params["block3"]:
        x = res_bottleneck(x, blk)
    x = downsample(x, params["ds2"])
    for blk in params["block4"]:
        x = res_bottleneck(x, blk)
    x = downsample(x, params["ds3"])
    # x is already (B, L, C)  == torch's rearrange 'b c l -> b l c'
    N = x.shape[1]
    x = x + params["pos"][None, :N, :]                        # AbsPositionalEncoding (dropout p=0)
    x = ms_attention(x, params["attn"], num_heads)
    g = global_avg_pool(x)                                    # 'b l c -> b c l' + AdaptiveAvgPool1d(1)
    h = fused_matmul(g[None], params["mlp1"]["w"], params["mlp1"]["b"], act_slope=0.2)
    out = fused_matmul(h[None], params["mlp2"]["w"], params["mlp2"]["b"])
    return out


# ---------------------------------------------------------------------------
# Pure-JAX reference (same parametrization) for correctness checking
# ---------------------------------------------------------------------------
def ref_forward(params, x_bcl, num_heads=8):
    def conv(x, w, b, stride=1, dilation=1):
        taps = _conv_taps(x, w.shape[0], stride, dilation, 0.0)
        return jnp.einsum("kblc,kcd->bld", taps, w) + b

    def lrelu(y):
        return jnp.where(y >= 0, y, 0.2 * y)

    def bn(y, ss):
        return y * ss[0] + ss[1]

    def res_block(x, p):
        out = bn(lrelu(conv(x, p["w1"], p["b1"])), p["bn1"])
        out = bn(lrelu(conv(out, p["w2"], p["b2"], dilation=p["dilation"])), p["bn2"])
        out = bn(lrelu(conv(out, p["w3"], p["b3"])), p["bn3"])
        return jnp.maximum(out + x, 0.0)

    def ds(x, p):
        mt = _conv_taps(x, 3, 2, 1, _NEG)
        mp = jnp.max(mt, axis=0)
        cv = conv(x, p["w"], p["b"], stride=2)
        return jnp.concatenate([mp, cv], axis=-1)

    x = jnp.transpose(x_bcl, (0, 2, 1)).astype(jnp.float32)
    x = conv(x, params["init_conv"]["w"], params["init_conv"]["b"], stride=2)
    for blk in params["block2"]:
        x = res_block(x, blk)
    x = ds(x, params["ds1"])
    for blk in params["block3"]:
        x = res_block(x, blk)
    x = ds(x, params["ds2"])
    for blk in params["block4"]:
        x = res_block(x, blk)
    x = ds(x, params["ds3"])
    B, N, C = x.shape
    x = x + params["pos"][None, :N, :]
    H = num_heads
    Dh = C // H
    scale = Dh ** (-0.5)
    a = params["attn"]
    q = (x @ a["wq"][0] + a["bq"]).reshape(B, N, H, Dh).transpose(0, 2, 1, 3)
    kv = (x @ a["wkv"][0] + a["bkv"]).reshape(B, N, 2, H, Dh)
    k = kv[:, :, 0].transpose(0, 2, 1, 3)
    v = kv[:, :, 1].transpose(0, 2, 1, 3)
    attn = jnp.einsum("bhnd,bhmd->bhnm", q * scale, k)        # no softmax, per the spec
    o = jnp.einsum("bhnm,bhmd->bhnd", attn, v)
    o = o.transpose(0, 2, 1, 3).reshape(B, N, C)
    o = o @ a["wproj"][0] + a["bproj"]
    g = jnp.mean(o, axis=1)
    h = jnp.where(g @ params["mlp1"]["w"][0] + params["mlp1"]["b"] >= 0,
                  g @ params["mlp1"]["w"][0] + params["mlp1"]["b"],
                  0.2 * (g @ params["mlp1"]["w"][0] + params["mlp1"]["b"]))
    return h @ params["mlp2"]["w"][0] + params["mlp2"]["b"]


if __name__ == "__main__":
    B, Cin, L = 2, 4, 64
    nclass = 5
    hidden_dims = [8, 16, 32, 64]   # must double at each Downsample stage
    num_heads = 8

    key = jax.random.PRNGKey(0)
    kp, kx = jax.random.split(key)
    params = init_params(kp, Cin, nclass, hidden_dims)
    x = jax.random.normal(kx, (B, Cin, L), dtype=jnp.float32)

    out = convformer_forward(params, x, num_heads=num_heads)
    out = jax.block_until_ready(out)

    assert out.shape == (B, nclass)
    assert bool(jnp.all(jnp.isfinite(out)))

    ref = ref_forward(params, x, num_heads=num_heads)
    assert jnp.allclose(out, ref, atol=2e-3, rtol=2e-3), "Pallas output mismatch vs JAX reference"
    print("KERNEL_OK")
</pallas_src>

<mosaic_0001>
module attributes {stable_mosaic.version = 11 : i64} {
  func.func @_fused_mm_kernel(%arg0: i32, %arg1: memref<3x64x4xf32, #tpu.memory_space<vmem>>, %arg2: memref<3x4x8xf32, #tpu.memory_space<vmem>>, %arg3: memref<1x8xf32, #tpu.memory_space<vmem>>, %arg4: memref<1x8xf32, #tpu.memory_space<vmem>>, %arg5: memref<1x8xf32, #tpu.memory_space<vmem>>, %arg6: memref<64x8xf32, #tpu.memory_space<vmem>>) attributes {dimension_semantics = [#tpu.dimension_semantics<parallel>], iteration_bounds = array<i64: 1>, scalar_prefetch = 0 : i64, scratch_operands = 0 : i64, tpu.core_type = #tpu.core_type<tc>, window_params = [{transform_indices = @transform_0, window_bounds = array<i64: 3, 64, 4>}, {pipeline_mode = #tpu.pipeline_mode<synchronous>, transform_indices = @transform_1, window_bounds = array<i64: 3, 4, 8>}, {pipeline_mode = #tpu.pipeline_mode<synchronous>, transform_indices = @transform_2, window_bounds = array<i64: 1, 8>}, {pipeline_mode = #tpu.pipeline_mode<synchronous>, transform_indices = @transform_3, window_bounds = array<i64: 1, 8>}, {pipeline_mode = #tpu.pipeline_mode<synchronous>, transform_indices = @transform_4, window_bounds = array<i64: 1, 8>}, {transform_indices = @transform_5, window_bounds = array<i64: 64, 8>}]} {
    %c0 = arith.constant 0 : index
    %c0_0 = arith.constant 0 : index
    %c0_1 = arith.constant 0 : index
    %0 = vector.load %arg1[%c0, %c0_0, %c0_1] : memref<3x64x4xf32, #tpu.memory_space<vmem>>, vector<1x64x4xf32>
    %1 = vector.shape_cast %0 : vector<1x64x4xf32> to vector<64x4xf32>
    %c0_2 = arith.constant 0 : index
    %c0_3 = arith.constant 0 : index
    %c0_4 = arith.constant 0 : index
    %2 = vector.load %arg2[%c0_2, %c0_3, %c0_4] : memref<3x4x8xf32, #tpu.memory_space<vmem>>, vector<1x4x8xf32>
    %3 = vector.shape_cast %2 : vector<1x4x8xf32> to vector<4x8xf32>
    %cst = arith.constant dense<0.000000e+00> : vector<64x8xf32>
    %4 = tpu.matmul %1, %3, %cst {dimension_numbers = #tpu.dot_dimension_numbers<[1], [0], [0], [1], [0, 0, 1, 1], [], []>, precision = #tpu.contract_precision<fp32>} : vector<64x4xf32>, vector<4x8xf32>, vector<64x8xf32> -> vector<64x8xf32>
    %c1 = arith.constant 1 : index
    %c0_5 = arith.constant 0 : index
    %c0_6 = arith.constant 0 : index
    %5 = vector.load %arg1[%c1, %c0_5, %c0_6] : memref<3x64x4xf32, #tpu.memory_space<vmem>>, vector<1x64x4xf32>
    %6 = vector.shape_cast %5 : vector<1x64x4xf32> to vector<64x4xf32>
    %c1_7 = arith.constant 1 : index
    %c0_8 = arith.constant 0 : index
    %c0_9 = arith.constant 0 : index
    %7 = vector.load %arg2[%c1_7, %c0_8, %c0_9] : memref<3x4x8xf32, #tpu.memory_space<vmem>>, vector<1x4x8xf32>
    %8 = vector.shape_cast %7 : vector<1x4x8xf32> to vector<4x8xf32>
    %cst_10 = arith.constant dense<0.000000e+00> : vector<64x8xf32>
    %9 = tpu.matmul %6, %8, %cst_10 {dimension_numbers = #tpu.dot_dimension_numbers<[1], [0], [0], [1], [0, 0, 1, 1], [], []>, precision = #tpu.contract_precision<fp32>} : vector<64x4xf32>, vector<4x8xf32>, vector<64x8xf32> -> vector<64x8xf32>
    %10 = arith.addf %4, %9 : vector<64x8xf32>
    %c2 = arith.constant 2 : index
    %c0_11 = arith.constant 0 : index
    %c0_12 = arith.constant 0 : index
    %11 = vector.load %arg1[%c2, %c0_11, %c0_12] : memref<3x64x4xf32, #tpu.memory_space<vmem>>, vector<1x64x4xf32>
    %12 = vector.shape_cast %11 : vector<1x64x4xf32> to vector<64x4xf32>
    %c2_13 = arith.constant 2 : index
    %c0_14 = arith.constant 0 : index
    %c0_15 = arith.constant 0 : index
    %13 = vector.load %arg2[%c2_13, %c0_14, %c0_15] : memref<3x4x8xf32, #tpu.memory_space<vmem>>, vector<1x4x8xf32>
    %14 = vector.shape_cast %13 : vector<1x4x8xf32> to vector<4x8xf32>
    %cst_16 = arith.constant dense<0.000000e+00> : vector<64x8xf32>
    %15 = tpu.matmul %12, %14, %cst_16 {dimension_numbers = #tpu.dot_dimension_numbers<[1], [0], [0], [1], [0, 0, 1, 1], [], []>, precision = #tpu.contract_precision<fp32>} : vector<64x4xf32>, vector<4x8xf32>, vector<64x8xf32> -> vector<64x8xf32>
    %16 = arith.addf %10, %15 : vector<64x8xf32>
    %c0_17 = arith.constant 0 : index
    %c0_18 = arith.constant 0 : index
    %17 = vector.load %arg3[%c0_17, %c0_18] : memref<1x8xf32, #tpu.memory_space<vmem>>, vector<1x8xf32>
    %18 = vector.broadcast %17 : vector<1x8xf32> to vector<64x8xf32>
    %19 = arith.addf %16, %18 : vector<64x8xf32>
    %c0_19 = arith.constant 0 : index
    %c0_20 = arith.constant 0 : index
    %20 = vector.load %arg4[%c0_19, %c0_20] : memref<1x8xf32, #tpu.memory_space<vmem>>, vector<1x8xf32>
    %21 = vector.broadcast %20 : vector<1x8xf32> to vector<64x8xf32>
    %22 = arith.mulf %19, %21 : vector<64x8xf32>
    %c0_21 = arith.constant 0 : index
    %c0_22 = arith.constant 0 : index
    %23 = vector.load %arg5[%c0_21, %c0_22] : memref<1x8xf32, #tpu.memory_space<vmem>>, vector<1x8xf32>
    %24 = vector.broadcast %23 : vector<1x8xf32> to vector<64x8xf32>
    %25 = arith.addf %22, %24 : vector<64x8xf32>
    %c0_23 = arith.constant 0 : index
    %c0_24 = arith.constant 0 : index
    %26 = vector.load %arg6[%c0_23, %c0_24] : memref<64x8xf32, #tpu.memory_space<vmem>>, vector<64x8xf32>
    tpu.vector_store %arg6[%c0_23, %c0_24], %25 {strides = array<i32>} : memref<64x8xf32, #tpu.memory_space<vmem>>, vector<64x8xf32>,
    return
  }
  func.func @transform_0(%arg0: i32) -> (i32, i32, i32) {
    %c0_i32 = arith.constant 0 : i32
    %c0_i32_0 = arith.constant 0 : i32
    %c0_i32_1 = arith.constant 0 : i32
    return %c0_i32, %arg0, %c0_i32_0 : i32, i32, i32
  }
  func.func @transform_1(%arg0: i32) -> (i32, i32, i32) {
    %c0_i32 = arith.constant 0 : i32
    %c0_i32_0 = arith.constant 0 : i32
    %c0_i32_1 = arith.constant 0 : i32
    %c0_i32_2 = arith.constant 0 : i32
    return %c0_i32, %c0_i32_0, %c0_i32_1 : i32, i32, i32
  }
  func.func @transform_2(%arg0: i32) -> (i32, i32) {
    %c0_i32 = arith.constant 0 : i32
    %c0_i32_0 = arith.constant 0 : i32
    %c0_i32_1 = arith.constant 0 : i32
    return %c0_i32, %c0_i32_0 : i32, i32
  }
  func.func @transform_3(%arg0: i32) -> (i32, i32) {
    %c0_i32 = arith.constant 0 : i32
    %c0_i32_0 = arith.constant 0 : i32
    %c0_i32_1 = arith.constant 0 : i32
    return %c0_i32, %c0_i32_0 : i32, i32
  }
  func.func @transform_4(%arg0: i32) -> (i32, i32) {
    %c0_i32 = arith.constant 0 : i32
    %c0_i32_0 = arith.constant 0 : i32
    %c0_i32_1 = arith.constant 0 : i32
    return %c0_i32, %c0_i32_0 : i32, i32
  }
  func.func @transform_5(%arg0: i32) -> (i32, i32) {
    %c0_i32 = arith.constant 0 : i32
    %c0_i32_0 = arith.constant 0 : i32
    return %arg0, %c0_i32 : i32, i32
  }
}

</mosaic_0001>

<llo_original>
// kernel: tpu_custom_call.1
$region0: #{tpu_custom_call.1}
  #allocation0 [shape = 'u32[]', space=smem, size = 0x4, offset = 0x4, fixed_abs, tag = 'smem constant byte address 0x4 - core index']
  #allocation1 [shape = 'u32[144,128]{1,0:T(1,128)}', space=vmem, size = 0x12000, scoped, tag = 'internal scratch']
  %s0 = inlined_call_operand.vmem [shape: f32[3,64,4], index: 0, kind: input, shape index: {}]
  %s1 = inlined_call_operand.vmem [shape: f32[3,4,8], index: 1, kind: input, shape index: {}]
  %s2 = inlined_call_operand.vmem [shape: f32[1,8], index: 2, kind: input, shape index: {}]
  %s3 = inlined_call_operand.vmem [shape: f32[1,8], index: 3, kind: input, shape index: {}]
  %s4 = inlined_call_operand.vmem [shape: f32[1,8], index: 4, kind: input, shape index: {}]
  %s5 = inlined_call_operand.vmem [shape: f32[64,8], index: 5, kind: output, shape index: {}]
  %s6 = sld [smem:[#allocation0]]
  $region30: #{tpu_custom_call.1} parent=0
    _
  %s8 = ssub.s32 1, %s6
  %s9 = scalar_select 0, %s8, %s6
  // Predicated region
  $region2: #{tpu_custom_call.1} parent=0 // pred_check
    _
  $region3: #{tpu_custom_call.1} parent=0 // pred_check_branch
    %11 = sbr.rel (0) target = $region5
  $region4: #{tpu_custom_call.1} parent=0 // pred_region
    _
  $region5: #{tpu_custom_call.1} parent=0 // pred_fallthru
    _
  // Predicated region
  $region6: #{tpu_custom_call.1} parent=0 // pred_check
    _
  $region7: #{tpu_custom_call.1} parent=0 // pred_check_branch
    %13 = sbr.rel (0) target = $region9
  $region8: #{tpu_custom_call.1} parent=0 // pred_region
    _
  $region9: #{tpu_custom_call.1} parent=0 // pred_fallthru
    _
  // Predicated region
  $region10: #{tpu_custom_call.1} parent=0 // pred_check
    _
  $region11: #{tpu_custom_call.1} parent=0 // pred_check_branch
    %15 = sbr.rel (0) target = $region13
  $region12: #{tpu_custom_call.1} parent=0 // pred_region
    _
  $region13: #{tpu_custom_call.1} parent=0 // pred_fallthru
    _
  // Predicated region
  $region14: #{tpu_custom_call.1} parent=0 // pred_check
    _
  $region15: #{tpu_custom_call.1} parent=0 // pred_check_branch
    %17 = sbr.rel (0) target = $region17
  $region16: #{tpu_custom_call.1} parent=0 // pred_region
    _
  $region17: #{tpu_custom_call.1} parent=0 // pred_fallthru
    _
  // Predicated region
  $region18: #{tpu_custom_call.1} parent=0 // pred_check
    _
  $region19: #{tpu_custom_call.1} parent=0 // pred_check_branch
    %19 = sbr.rel (0) target = $region21
  $region20: #{tpu_custom_call.1} parent=0 // pred_region
    _
  $region21: #{tpu_custom_call.1} parent=0 // pred_fallthru
    _
  %v20 = vld [vmem:[%s0] sm:$0xff]
  %v21 = vld [vmem:[%s0 + $0x8] sm:$0xff]
  %v22 = vld [vmem:[%s0 + $0x10] sm:$0xff]
  %v23 = vld [vmem:[%s0 + $0x18] sm:$0xff]
  %v24 = vld [vmem:[%s0 + $0x20] sm:$0xff]
  %v25 = vld [vmem:[%s0 + $0x28] sm:$0xff]
  %v26 = vld [vmem:[%s0 + $0x30] sm:$0xff]
  %v27 = vld [vmem:[%s0 + $0x38] sm:$0xff]
  %v28 = vld [vmem:[%s1] sm:$0xf]
  %s29 = scalar_lea.vmem %s0, 64
  %v30 = vld [vmem:[%s29] sm:$0xff]
  %v31 = vld [vmem:[%s29 + $0x8] sm:$0xff]
  %v32 = vld [vmem:[%s29 + $0x10] sm:$0xff]
  %v33 = vld [vmem:[%s29 + $0x18] sm:$0xff]
  %v34 = vld [vmem:[%s29 + $0x20] sm:$0xff]
  %v35 = vld [vmem:[%s29 + $0x28] sm:$0xff]
  %v36 = vld [vmem:[%s29 + $0x30] sm:$0xff]
  %v37 = vld [vmem:[%s29 + $0x38] sm:$0xff]
  %s38 = scalar_lea.vmem %s1, 4
  %v39 = vld [vmem:[%s38] sm:$0xf]
  %vm40 = vcmask 31744
  %v42 = vsel %vm40, %v30, 0
  %v45 = vsel %vm40, %v31, 0
  %v48 = vsel %vm40, %v32, 0
  %v51 = vsel %vm40, %v33, 0
  %v54 = vsel %vm40, %v34, 0
  %v57 = vsel %vm40, %v35, 0
  %v60 = vsel %vm40, %v36, 0
  %v63 = vsel %vm40, %v37, 0
  %vm65 = vcmask 1043456
  %v67 = vsel %vm65, %v39, 0
  %69 = vmatprep.subr.mxu0 0.0
  %v70 = vand.u32 %v67, 4294901760
  %71 = vmatpush1.msra.mxu0 %v70
  %72 = vmatprep.subr.mxu0 0.0
  %73 = vmatpush1.msra.mxu0 0.0
  %74 = vmatprep.subr.mxu0 0.0
  %75 = vmatpush1.msra.mxu0 0.0
  %76 = vmatprep.subr.mxu0 0.0
  %77 = vmatpush1.msra.mxu0 0.0
  %78 = vmatprep.subr.mxu0 0.0
  %79 = vmatpush1.msra.mxu0 0.0
  %80 = vmatprep.subr.mxu0 0.0
  %81 = vmatpush1.msra.mxu0 0.0
  %82 = vmatprep.subr.mxu0 0.0
  %83 = vmatpush1.msra.mxu0 0.0
  %84 = vmatprep.subr.mxu0 0.0
  %85 = vmatpush1.msra.mxu0 0.0
  %86 = vmatprep.subr.mxu0 0.0
  %87 = vmatpush1.msra.mxu0 0.0
  %88 = vmatprep.subr.mxu0 0.0
  %89 = vmatpush1.msra.mxu0 0.0
  %90 = vmatprep.subr.mxu0 0.0
  %91 = vmatpush1.msra.mxu0 0.0
  %92 = vmatprep.subr.mxu0 0.0
  %93 = vmatpush1.msra.mxu0 0.0
  %94 = vmatprep.subr.mxu0 0.0
  %95 = vmatpush1.msra.mxu0 0.0
  %96 = vmatprep.subr.mxu0 0.0
  %97 = vmatpush1.msra.mxu0 0.0
  %98 = vmatprep.subr.mxu0 0.0
  %99 = vmatpush1.msra.mxu0 0.0
  %100 = vmatprep.subr.mxu0 0.0
  %101 = vmatpush1.msra.mxu0 0.0
  %102 = vmatprep.subr.mxu0 0.0
  %103 = vmatpush1.msra.mxu0 0.0
  %104 = vmatprep.subr.mxu0 0.0
  %105 = vmatpush1.msra.mxu0 0.0
  %106 = vmatprep.subr.mxu0 0.0
  %107 = vmatpush1.msra.mxu0 0.0
  %108 = vmatprep.subr.mxu0 0.0
  %109 = vmatpush1.msra.mxu0 0.0
  %110 = vmatprep.subr.mxu0 0.0
  %111 = vmatpush1.msra.mxu0 0.0
  %112 = vmatprep.subr.mxu0 0.0
  %113 = vmatpush1.msra.mxu0 0.0
  %114 = vmatprep.subr.mxu0 0.0
  %115 = vmatpush1.msra.mxu0 0.0
  %116 = vmatprep.subr.mxu0 0.0
  %117 = vmatpush1.msra.mxu0 0.0
  %118 = vmatprep.subr.mxu0 0.0
  %119 = vmatpush1.msra.mxu0 0.0
  %120 = vmatprep.subr.mxu0 0.0
  %121 = vmatpush1.msra.mxu0 0.0
  %122 = vmatprep.subr.mxu0 0.0
  %123 = vmatpush1.msra.mxu0 0.0
  %124 = vmatprep.subr.mxu0 0.0
  %125 = vmatpush1.msra.mxu0 0.0
  %126 = vmatprep.subr.mxu0 0.0
  %127 = vmatpush1.msra.mxu0 0.0
  %128 = vmatprep.subr.mxu0 0.0
  %129 = vmatpush1.msra.mxu0 0.0
  %130 = vmatprep.subr.mxu0 0.0
  %131 = vmatpush1.msra.mxu0 0.0
  %132 = vmatprep.subr.mxu0 0.0
  %133 = vmatpush1.msra.mxu0 0.0
  %134 = vmatprep.mubr.f32.mxu0 0.0
  %v135 = vand.u32 %v42, 4294901760
  %v136 = vsub.f32 %v42, %v135
  %v137 = vand.u32 %v136, 4294901760
  %v138 = vsub.f32 %v136, %v137
  %v139 = vand.u32 %v138, 4294901760
  %140 = vmatmul.mubr.f32.gmra.mrb[0].mxu0 %v139
  %v141 = vpop.f32.mrb[0].mxu0
  %v142 = vadd.f32 0.0, %v141
  %v143 = vpop.f32.mrb[0].mxu0
  %144 = vmatprep.mubr.f32.mxu0 0.0
  %v145 = vand.u32 %v45, 4294901760
  %v146 = vsub.f32 %v45, %v145
  %v147 = vand.u32 %v146, 4294901760
  %v148 = vsub.f32 %v146, %v147
  %v149 = vand.u32 %v148, 4294901760
  %150 = vmatmul.mubr.f32.gmra.mrb[0].mxu0 %v149
  %v151 = vpop.f32.mrb[0].mxu0
  %v152 = vadd.f32 0.0, %v151
  %v153 = vpop.f32.mrb[0].mxu0
  %154 = vmatprep.mubr.f32.mxu0 0.0
  %v155 = vand.u32 %v48, 4294901760
  %v156 = vsub.f32 %v48, %v155
  %v157 = vand.u32 %v156, 4294901760
  %v158 = vsub.f32 %v156, %v157
  %v159 = vand.u32 %v158, 4294901760
  %160 = vmatmul.mubr.f32.gmra.mrb[0].mxu0 %v159
  %v161 = vpop.f32.mrb[0].mxu0
  %v162 = vadd.f32 0.0, %v161
  %v163 = vpop.f32.mrb[0].mxu0
  %164 = vmatprep.mubr.f32.mxu0 0.0
  %v165 = vand.u32 %v51, 4294901760
  %v166 = vsub.f32 %v51, %v165
  %v167 = vand.u32 %v166, 4294901760
  %v168 = vsub.f32 %v166, %v167
  %v169 = vand.u32 %v168, 4294901760
  %170 = vmatmul.mubr.f32.gmra.mrb[0].mxu0 %v169
  %v171 = vpop.f32.mrb[0].mxu0
  %v172 = vadd.f32 0.0, %v171
  %v173 = vpop.f32.mrb[0].mxu0
  %174 = vmatprep.mubr.f32.mxu0 0.0
  %v175 = vand.u32 %v54, 4294901760
  %v176 = vsub.f32 %v54, %v175
  %v177 = vand.u32 %v176, 4294901760
  %v178 = vsub.f32 %v176, %v177
  %v179 = vand.u32 %v178, 4294901760
  %180 = vmatmul.mubr.f32.gmra.mrb[0].mxu0 %v179
  %v181 = vpop.f32.mrb[0].mxu0
  %v182 = vadd.f32 0.0, %v181
  %v183 = vpop.f32.mrb[0].mxu0
  %184 = vmatprep.mubr.f32.mxu0 0.0
  %v185 = vand.u32 %v57, 4294901760
  %v186 = vsub.f32 %v57, %v185
  %v187 = vand.u32 %v186, 4294901760
  %v188 = vsub.f32 %v186, %v187
  %v189 = vand.u32 %v188, 4294901760
  %190 = vmatmul.mubr.f32.gmra.mrb[0].mxu0 %v189
  %v191 = vpop.f32.mrb[0].mxu0
  %v192 = vadd.f32 0.0, %v191
  %v193 = vpop.f32.mrb[0].mxu0
  %194 = vmatprep.mubr.f32.mxu0 0.0
  %v195 = vand.u32 %v60, 4294901760
  %v196 = vsub.f32 %v60, %v195
  %v197 = vand.u32 %v196, 4294901760
  %v198 = vsub.f32 %v196, %v197
  %v199 = vand.u32 %v198, 4294901760
  %200 = vmatmul.mubr.f32.gmra.mrb[0].mxu0 %v199
  %v201 = vpop.f32.mrb[0].mxu0
  %v202 = vadd.f32 0.0, %v201
  %v203 = vpop.f32.mrb[0].mxu0
  %204 = vmatprep.mubr.f32.mxu0 0.0
  %v205 = vand.u32 %v63, 4294901760
  %v206 = vsub.f32 %v63, %v205
  %v207 = vand.u32 %v206, 4294901760
  %v208 = vsub.f32 %v206, %v207
  %v209 = vand.u32 %v208, 4294901760
  %210 = vmatmul.mubr.f32.gmra.mrb[0].mxu0 %v209
  %v211 = vpop.f32.mrb[0].mxu0
  %v212 = vadd.f32 0.0, %v211
  %v213 = vpop.f32.mrb[0].mxu0
  %214 = vdwg.mxu0
  %215 = vmatprep.subr.mxu0 0.0
  %v216 = vand.u32 %v67, 4294901760
  %v217 = vsub.f32 %v67, %v216
  %v218 = vand.u32 %v217, 4294901760
  %v219 = vsub.f32 %v217, %v218
  %v220 = vand.u32 %v219, 4294901760
  %221 = vmatpush1.msra.mxu0 %v220
  %222 = vmatprep.subr.mxu0 0.0
  %223 = vmatpush1.msra.mxu0 0.0
  %224 = vmatprep.subr.mxu0 0.0
  %225 = vmatpush1.msra.mxu0 0.0
  %226 = vmatprep.subr.mxu0 0.0
  %227 = vmatpush1.msra.mxu0 0.0
  %228 = vmatprep.subr.mxu0 0.0
  %229 = vmatpush1.msra.mxu0 0.0
  %230 = vmatprep.subr.mxu0 0.0
  %231 = vmatpush1.msra.mxu0 0.0
  %232 = vmatprep.subr.mxu0 0.0
  %233 = vmatpush1.msra.mxu0 0.0
  %234 = vmatprep.subr.mxu0 0.0
  %235 = vmatpush1.msra.mxu0 0.0
  %236 = vmatprep.subr.mxu0 0.0
  %237 = vmatpush1.msra.mxu0 0.0
  %238 = vmatprep.subr.mxu0 0.0
  %239 = vmatpush1.msra.mxu0 0.0
  %240 = vmatprep.subr.mxu0 0.0
  %241 = vmatpush1.msra.mxu0 0.0
  %242 = vmatprep.subr.mxu0 0.0
  %243 = vmatpush1.msra.mxu0 0.0
  %244 = vmatprep.subr.mxu0 0.0
  %245 = vmatpush1.msra.mxu0 0.0
  %246 = vmatprep.subr.mxu0 0.0
  %247 = vmatpush1.msra.mxu0 0.0
  %248 = vmatprep.subr.mxu0 0.0
  %249 = vmatpush1.msra.mxu0 0.0
  %250 = vmatprep.subr.mxu0 0.0
  %251 = vmatpush1.msra.mxu0 0.0
  %252 = vmatprep.subr.mxu0 0.0
  %253 = vmatpush1.msra.mxu0 0.0
  %254 = vmatprep.subr.mxu0 0.0
  %255 = vmatpush1.msra.mxu0 0.0
  %256 = vmatprep.subr.mxu0 0.0
  %257 = vmatpush1.msra.mxu0 0.0
  %258 = vmatprep.subr.mxu0 0.0
  %259 = vmatpush1.msra.mxu0 0.0
  %260 = vmatprep.subr.mxu0 0.0
  %261 = vmatpush1.msra.mxu0 0.0
  %262 = vmatprep.subr.mxu0 0.0
  %263 = vmatpush1.msra.mxu0 0.0
  %264 = vmatprep.subr.mxu0 0.0
  %265 = vmatpush1.msra.mxu0 0.0
  %266 = vmatprep.subr.mxu0 0.0
  %267 = vmatpush1.msra.mxu0 0.0
  %268 = vmatprep.subr.mxu0 0.0
  %269 = vmatpush1.msra.mxu0 0.0
  %270 = vmatprep.subr.mxu0 0.0
  %271 = vmatpush1.msra.mxu0 0.0
  %272 = vmatprep.subr.mxu0 0.0
  %273 = vmatpush1.msra.mxu0 0.0
  %274 = vmatprep.subr.mxu0 0.0
  %275 = vmatpush1.msra.mxu0 0.0
  %276 = vmatprep.subr.mxu0 0.0
  %277 = vmatpush1.msra.mxu0 0.0
  %278 = vmatprep.subr.mxu0 0.0
  %279 = vmatpush1.msra.mxu0 0.0
  %280 = vmatprep.subr.mxu0 0.0
  %281 = vmatpush1.msra.mxu0 0.0
  %282 = vmatprep.subr.mxu0 0.0
  %283 = vmatpush1.msra.mxu0 0.0
  %284 = vmatprep.mubr.f32.mxu0 0.0
  %v285 = vand.u32 %v42, 4294901760
  %286 = vmatmul.mubr.f32.gmra.mrb[0].mxu0 %v285
  %v287 = vpop.f32.mrb[0].mxu0
  %v288 = vadd.f32 %v142, %v287
  %v289 = vpop.f32.mrb[0].mxu0
  %290 = vmatprep.mubr.f32.mxu0 0.0
  %v291 = vand.u32 %v45, 4294901760
  %292 = vmatmul.mubr.f32.gmra.mrb[0].mxu0 %v291
  %v293 = vpop.f32.mrb[0].mxu0
  %v294 = vadd.f32 %v152, %v293
  %v295 = vpop.f32.mrb[0].mxu0
  %296 = vmatprep.mubr.f32.mxu0 0.0
  %v297 = vand.u32 %v48, 4294901760
  %298 = vmatmul.mubr.f32.gmra.mrb[0].mxu0 %v297
  %v299 = vpop.f32.mrb[0].mxu0
  %v300 = vadd.f32 %v162, %v299
  %v301 = vpop.f32.mrb[0].mxu0
  %302 = vmatprep.mubr.f32.mxu0 0.0
  %v303 = vand.u32 %v51, 4294901760
  %304 = vmatmul.mubr.f32.gmra.mrb[0].mxu0 %v303
  %v305 = vpop.f32.mrb[0].mxu0
  %v306 = vadd.f32 %v172, %v305
  %v307 = vpop.f32.mrb[0].mxu0
  %308 = vmatprep.mubr.f32.mxu0 0.0
  %v309 = vand.u32 %v54, 4294901760
  %310 = vmatmul.mubr.f32.gmra.mrb[0].mxu0 %v309
  %v311 = vpop.f32.mrb[0].mxu0
  %v312 = vadd.f32 %v182, %v311
  %v313 = vpop.f32.mrb[0].mxu0
  %314 = vmatprep.mubr.f32.mxu0 0.0
  %v315 = vand.u32 %v57, 4294901760
  %316 = vmatmul.mubr.f32.gmra.mrb[0].mxu0 %v315
  %v317 = vpop.f32.mrb[0].mxu0
  %v318 = vadd.f32 %v192, %v317
  %v319 = vpop.f32.mrb[0].mxu0
  %320 = vmatprep.mubr.f32.mxu0 0.0
  %v321 = vand.u32 %v60, 4294901760
  %322 = vmatmul.mubr.f32.gmra.mrb[0].mxu0 %v321
  %v323 = vpop.f32.mrb[0].mxu0
  %v324 = vadd.f32 %v202, %v323
  %v325 = vpop.f32.mrb[0].mxu0
  %326 = vmatprep.mubr.f32.mxu0 0.0
  %v327 = vand.u32 %v63, 4294901760
  %328 = vmatmul.mubr.f32.gmra.mrb[0].mxu0 %v327
  %v329 = vpop.f32.mrb[0].mxu0
  %v330 = vadd.f32 %v212, %v329
  %v331 = vpop.f32.mrb[0].mxu0
  %332 = vdwg.mxu0
  %333 = vmatprep.subr.mxu0 0.0
  %v334 = vand.u32 %v67, 4294901760
  %v335 = vsub.f32 %v67, %v334
  %336 = vmatpush1.msra.mxu0 %v335
  %337 = vmatprep.subr.mxu0 0.0
  %338 = vmatpush1.msra.mxu0 0.0
  %339 = vmatprep.subr.mxu0 0.0
  %340 = vmatpush1.msra.mxu0 0.0
  %341 = vmatprep.subr.mxu0 0.0
  %342 = vmatpush1.msra.mxu0 0.0
  %343 = vmatprep.subr.mxu0 0.0
  %344 = vmatpush1.msra.mxu0 0.0
  %345 = vmatprep.subr.mxu0 0.0
  %346 = vmatpush1.msra.mxu0 0.0
  %347 = vmatprep.subr.mxu0 0.0
  %348 = vmatpush1.msra.mxu0 0.0
  %349 = vmatprep.subr.mxu0 0.0
  %350 = vmatpush1.msra.mxu0 0.0
  %351 = vmatprep.subr.mxu0 0.0
  %352 = vmatpush1.msra.mxu0 0.0
  %353 = vmatprep.subr.mxu0 0.0
  %354 = vmatpush1.msra.mxu0 0.0
  %355 = vmatprep.subr.mxu0 0.0
  %356 = vmatpush1.msra.mxu0 0.0
  %357 = vmatprep.subr.mxu0 0.0
  %358 = vmatpush1.msra.mxu0 0.0
  %359 = vmatprep.subr.mxu0 0.0
  %360 = vmatpush1.msra.mxu0 0.0
  %361 = vmatprep.subr.mxu0 0.0
  %362 = vmatpush1.msra.mxu0 0.0
  %363 = vmatprep.subr.mxu0 0.0
  %364 = vmatpush1.msra.mxu0 0.0
  %365 = vmatprep.subr.mxu0 0.0
  %366 = vmatpush1.msra.mxu0 0.0
  %367 = vmatprep.subr.mxu0 0.0
  %368 = vmatpush1.msra.mxu0 0.0
  %369 = vmatprep.subr.mxu0 0.0
  %370 = vmatpush1.msra.mxu0 0.0
  %371 = vmatprep.subr.mxu0 0.0
  %372 = vmatpush1.msra.mxu0 0.0
  %373 = vmatprep.subr.mxu0 0.0
  %374 = vmatpush1.msra.mxu0 0.0
  %375 = vmatprep.subr.mxu0 0.0
  %376 = vmatpush1.msra.mxu0 0.0
  %377 = vmatprep.subr.mxu0 0.0
  %378 = vmatpush1.msra.mxu0 0.0
  %379 = vmatprep.subr.mxu0 0.0
  %380 = vmatpush1.msra.mxu0 0.0
  %381 = vmatprep.subr.mxu0 0.0
  %382 = vmatpush1.msra.mxu0 0.0
  %383 = vmatprep.subr.mxu0 0.0
  %384 = vmatpush1.msra.mxu0 0.0
  %385 = vmatprep.subr.mxu0 0.0
  %386 = vmatpush1.msra.mxu0 0.0
  %387 = vmatprep.subr.mxu0 0.0
  %388 = vmatpush1.msra.mxu0 0.0
  %389 = vmatprep.subr.mxu0 0.0
  %390 = vmatpush1.msra.mxu0 0.0
  %391 = vmatprep.subr.mxu0 0.0
  %392 = vmatpush1.msra.mxu0 0.0
  %393 = vmatprep.subr.mxu0 0.0
  %394 = vmatpush1.msra.mxu0 0.0
  %395 = vmatprep.subr.mxu0 0.0
  %396 = vmatpush1.msra.mxu0 0.0
  %397 = vmatprep.subr.mxu0 0.0
  %398 = vmatpush1.msra.mxu0 0.0
  %399 = vmatprep.mubr.f32.mxu0 0.0
  %v400 = vand.u32 %v42, 4294901760
  %v401 = vsub.f32 %v42, %v400
  %402 = vmatmul.mubr.f32.gmra.mrb[0].mxu0 %v401
  %v403 = vpop.f32.mrb[0].mxu0
  %v404 = vadd.f32 %v288, %v403
  %v405 = vpop.f32.mrb[0].mxu0
  %406 = vmatprep.mubr.f32.mxu0 0.0
  %v407 = vand.u32 %v45, 4294901760
  %v408 = vsub.f32 %v45, %v407
  %409 = vmatmul.mubr.f32.gmra.mrb[0].mxu0 %v408
  %v410 = vpop.f32.mrb[0].mxu0
  %v411 = vadd.f32 %v294, %v410
  %v412 = vpop.f32.mrb[0].mxu0
  %413 = vmatprep.mubr.f32.mxu0 0.0
  %v414 = vand.u32 %v48, 4294901760
  %v415 = vsub.f32 %v48, %v414
  %416 = vmatmul.mubr.f32.gmra.mrb[0].mxu0 %v415
  %v417 = vpop.f32.mrb[0].mxu0
  %v418 = vadd.f32 %v300, %v417
  %v419 = vpop.f32.mrb[0].mxu0
  %420 = vmatprep.mubr.f32.mxu0 0.0
  %v421 = vand.u32 %v51, 4294901760
  %v422 = vsub.f32 %v51, %v421
  %423 = vmatmul.mubr.f32.gmra.mrb[0].mxu0 %v422
  %v424 = vpop.f32.mrb[0].mxu0
  %v425 = vadd.f32 %v306, %v424
  %v426 = vpop.f32.mrb[0].mxu0
  %427 = vmatprep.mubr.f32.mxu0 0.0
  %v428 = vand.u32 %v54, 4294901760
  %v429 = vsub.f32 %v54, %v428
  %430 = vmatmul.mubr.f32.gmra.mrb[0].mxu0 %v429
  %v431 = vpop.f32.mrb[0].mxu0
  %v432 = vadd.f32 %v312, %v431
  %v433 = vpop.f32.mrb[0].mxu0
  %434 = vmatprep.mubr.f32.mxu0 0.0
  %v435 = vand.u32 %v57, 4294901760
  %v436 = vsub.f32 %v57, %v435
  %437 = vmatmul.mubr.f32.gmra.mrb[0].mxu0 %v436
  %v438 = vpop.f32.mrb[0].mxu0
  %v439 = vadd.f32 %v318, %v438
  %v440 = vpop.f32.mrb[0].mxu0
  %441 = vmatprep.mubr.f32.mxu0 0.0
  %v442 = vand.u32 %v60, 4294901760
  %v443 = vsub.f32 %v60, %v442
  %444 = vmatmul.mubr.f32.gmra.mrb[0].mxu0 %v443
  %v445 = vpop.f32.mrb[0].mxu0
  %v446 = vadd.f32 %v324, %v445
  %v447 = vpop.f32.mrb[0].mxu0
  %448 = vmatprep.mubr.f32.mxu0 0.0
  %v449 = vand.u32 %v63, 4294901760
  %v450 = vsub.f32 %v63, %v449
  %451 = vmatmul.mubr.f32.gmra.mrb[0].mxu0 %v450
  %v452 = vpop.f32.mrb[0].mxu0
  %v453 = vadd.f32 %v330, %v452
  %v454 = vpop.f32.mrb[0].mxu0
  %455 = vdwg.mxu0
  %456 = vmatprep.subr.mxu0 0.0
  %v457 = vand.u32 %v67, 4294901760
  %458 = vmatpush1.msra.mxu0 %v457
  %459 = vmatprep.subr.mxu0 0.0
  %460 = vmatpush1.msra.mxu0 0.0
  %461 = vmatprep.subr.mxu0 0.0
  %462 = vmatpush1.msra.mxu0 0.0
  %463 = vmatprep.subr.mxu0 0.0
  %464 = vmatpush1.msra.mxu0 0.0
  %465 = vmatprep.subr.mxu0 0.0
  %466 = vmatpush1.msra.mxu0 0.0
  %467 = vmatprep.subr.mxu0 0.0
  %468 = vmatpush1.msra.mxu0 0.0
  %469 = vmatprep.subr.mxu0 0.0
  %470 = vmatpush1.msra.mxu0 0.0
  %471 = vmatprep.subr.mxu0 0.0
  %472 = vmatpush1.msra.mxu0 0.0
  %473 = vmatprep.subr.mxu0 0.0
  %474 = vmatpush1.msra.mxu0 0.0
  %475 = vmatprep.subr.mxu0 0.0
  %476 = vmatpush1.msra.mxu0 0.0
  %477 = vmatprep.subr.mxu0 0.0
  %478 = vmatpush1.msra.mxu0 0.0
  %479 = vmatprep.subr.mxu0 0.0
  %480 = vmatpush1.msra.mxu0 0.0
  %481 = vmatprep.subr.mxu0 0.0
  %482 = vmatpush1.msra.mxu0 0.0
  %483 = vmatprep.subr.mxu0 0.0
  %484 = vmatpush1.msra.mxu0 0.0
  %485 = vmatprep.subr.mxu0 0.0
  %486 = vmatpush1.msra.mxu0 0.0
  %487 = vmatprep.subr.mxu0 0.0
  %488 = vmatpush1.msra.mxu0 0.0
  %489 = vmatprep.subr.mxu0 0.0
  %490 = vmatpush1.msra.mxu0 0.0
  %491 = vmatprep.subr.mxu0 0.0
  %492 = vmatpush1.msra.mxu0 0.0
  %493 = vmatprep.subr.mxu0 0.0
  %494 = vmatpush1.msra.mxu0 0.0
  %495 = vmatprep.subr.mxu0 0.0
  %496 = vmatpush1.msra.mxu0 0.0
  %497 = vmatprep.subr.mxu0 0.0
  %498 = vmatpush1.msra.mxu0 0.0
  %499 = vmatprep.subr.mxu0 0.0
  %500 = vmatpush1.msra.mxu0 0.0
  %501 = vmatprep.subr.mxu0 0.0
  %502 = vmatpush1.msra.mxu0 0.0
  %503 = vmatprep.subr.mxu0 0.0
  %504 = vmatpush1.msra.mxu0 0.0
  %505 = vmatprep.subr.mxu0 0.0
  %506 = vmatpush1.msra.mxu0 0.0
  %507 = vmatprep.subr.mxu0 0.0
  %508 = vmatpush1.msra.mxu0 0.0
  %509 = vmatprep.subr.mxu0 0.0
  %510 = vmatpush1.msra.mxu0 0.0
  %511 = vmatprep.subr.mxu0 0.0
  %512 = vmatpush1.msra.mxu0 0.0
  %513 = vmatprep.subr.mxu0 0.0
  %514 = vmatpush1.msra.mxu0 0.0
  %515 = vmatprep.subr.mxu0 0.0
  %516 = vmatpush1.msra.mxu0 0.0
  %517 = vmatprep.subr.mxu0 0.0
  %518 = vmatpush1.msra.mxu0 0.0
  %519 = vmatprep.subr.mxu0 0.0
  %520 = vmatpush1.msra.mxu0 0.0
  %521 = vmatprep.mubr.f32.mxu0 0.0
  %v522 = vand.u32 %v42, 4294901760
  %v523 = vsub.f32 %v42, %v522
  %v524 = vand.u32 %v523, 4294901760
  %525 = vmatmul.mubr.f32.gmra.mrb[0].mxu0 %v524
  %v526 = vpop.f32.mrb[0].mxu0
  %v527 = vadd.f32 %v404, %v526
  %v528 = vpop.f32.mrb[0].mxu0
  %529 = vmatprep.mubr.f32.mxu0 0.0
  %v530 = vand.u32 %v45, 4294901760
  %v531 = vsub.f32 %v45, %v530
  %v532 = vand.u32 %v531, 4294901760
  %533 = vmatmul.mubr.f32.gmra.mrb[0].mxu0 %v532
  %v534 = vpop.f32.mrb[0].mxu0
  %v535 = vadd.f32 %v411, %v534
  %v536 = vpop.f32.mrb[0].mxu0
  %537 = vmatprep.mubr.f32.mxu0 0.0
  %v538 = vand.u32 %v48, 4294901760
  %v539 = vsub.f32 %v48, %v538
  %v540 = vand.u32 %v539, 4294901760
  %541 = vmatmul.mubr.f32.gmra.mrb[0].mxu0 %v540
  %v542 = vpop.f32.mrb[0].mxu0
  %v543 = vadd.f32 %v418, %v542
  %v544 = vpop.f32.mrb[0].mxu0
  %545 = vmatprep.mubr.f32.mxu0 0.0
  %v546 = vand.u32 %v51, 4294901760
  %v547 = vsub.f32 %v51, %v546
  %v548 = vand.u32 %v547, 4294901760
  %549 = vmatmul.mubr.f32.gmra.mrb[0].mxu0 %v548
  %v550 = vpop.f32.mrb[0].mxu0
  %v551 = vadd.f32 %v425, %v550
  %v552 = vpop.f32.mrb[0].mxu0
  %553 = vmatprep.mubr.f32.mxu0 0.0
  %v554 = vand.u32 %v54, 4294901760
  %v555 = vsub.f32 %v54, %v554
  %v556 = vand.u32 %v555, 4294901760
  %557 = vmatmul.mubr.f32.gmra.mrb[0].mxu0 %v556
  %v558 = vpop.f32.mrb[0].mxu0
  %v559 = vadd.f32 %v432, %v558
  %v560 = vpop.f32.mrb[0].mxu0
  %561 = vmatprep.mubr.f32.mxu0 0.0
  %v562 = vand.u32 %v57, 4294901760
  %v563 = vsub.f32 %v57, %v562
  %v564 = vand.u32 %v563, 4294901760
  %565 = vmatmul.mubr.f32.gmra.mrb[0].mxu0 %v564
  %v566 = vpop.f32.mrb[0].mxu0
  %v567 = vadd.f32 %v439, %v566
  %v568 = vpop.f32.mrb[0].mxu0
  %569 = vmatprep.mubr.f32.mxu0 0.0
  %v570 = vand.u32 %v60, 4294901760
  %v571 = vsub.f32 %v60, %v570
  %v572 = vand.u32 %v571, 4294901760
  %573 = vmatmul.mubr.f32.gmra.mrb[0].mxu0 %v572
  %v574 = vpop.f32.mrb[0].mxu0
  %v575 = vadd.f32 %v446, %v574
  %v576 = vpop.f32.mrb[0].mxu0
  %577 = vmatprep.mubr.f32.mxu0 0.0
  %v578 = vand.u32 %v63, 4294901760
  %v579 = vsub.f32 %v63, %v578
  %v580 = vand.u32 %v579, 4294901760
  %581 = vmatmul.mubr.f32.gmra.mrb[0].mxu0 %v580
  %v582 = vpop.f32.mrb[0].mxu0
  %v583 = vadd.f32 %v453, %v582
  %v584 = vpop.f32.mrb[0].mxu0
  %585 = vdwg.mxu0
  %586 = vmatprep.subr.mxu0 0.0
  %v587 = vand.u32 %v67, 4294901760
  %v588 = vsub.f32 %v67, %v587
  %v589 = vand.u32 %v588, 4294901760
  %590 = vmatpush1.msra.mxu0 %v589
  %591 = vmatprep.subr.mxu0 0.0
  %592 = vmatpush1.msra.mxu0 0.0
  %593 = vmatprep.subr.mxu0 0.0
  %594 = vmatpush1.msra.mxu0 0.0
  %595 = vmatprep.subr.mxu0 0.0
  %596 = vmatpush1.msra.mxu0 0.0
  %597 = vmatprep.subr.mxu0 0.0
  %598 = vmatpush1.msra.mxu0 0.0
  %599 = vmatprep.subr.mxu0 0.0
  %600 = vmatpush1.msra.mxu0 0.0
  %601 = vmatprep.subr.mxu0 0.0
  %602 = vmatpush1.msra.mxu0 0.0
  %603 = vmatprep.subr.mxu0 0.0
  %604 = vmatpush1.msra.mxu0 0.0
  %605 = vmatprep.subr.mxu0 0.0
  %606 = vmatpush1.msra.mxu0 0.0
  %607 = vmatprep.subr.mxu0 0.0
  %608 = vmatpush1.msra.mxu0 0.0
  %609 = vmatprep.subr.mxu0 0.0
  %610 = vmatpush1.msra.mxu0 0.0
  %611 = vmatprep.subr.mxu0 0.0
  %612 = vmatpush1.msra.mxu0 0.0
  %613 = vmatprep.subr.mxu0 0.0
  %614 = vmatpush1.msra.mxu0 0.0
  %615 = vmatprep.subr.mxu0 0.0
  %616 = vmatpush1.msra.mxu0 0.0
  %617 = vmatprep.subr.mxu0 0.0
  %618 = vmatpush1.msra.mxu0 0.0
  %619 = vmatprep.subr.mxu0 0.0
  %620 = vmatpush1.msra.mxu0 0.0
  %621 = vmatprep.subr.mxu0 0.0
  %622 = vmatpush1.msra.mxu0 0.0
  %623 = vmatprep.subr.mxu0 0.0
  %624 = vmatpush1.msra.mxu0 0.0
  %625 = vmatprep.subr.mxu0 0.0
  %626 = vmatpush1.msra.mxu0 0.0
  %627 = vmatprep.subr.mxu0 0.0
  %628 = vmatpush1.msra.mxu0 0.0
  %629 = vmatprep.subr.mxu0 0.0
  %630 = vmatpush1.msra.mxu0 0.0
  %631 = vmatprep.subr.mxu0 0.0
  %632 = vmatpush1.msra.mxu0 0.0
  %633 = vmatprep.subr.mxu0 0.0
  %634 = vmatpush1.msra.mxu0 0.0
  %635 = vmatprep.subr.mxu0 0.0
  %636 = vmatpush1.msra.mxu0 0.0
  %637 = vmatprep.subr.mxu0 0.0
  %638 = vmatpush1.msra.mxu0 0.0
  %639 = vmatprep.subr.mxu0 0.0
  %640 = vmatpush1.msra.mxu0 0.0
  %641 = vmatprep.subr.mxu0 0.0
  %642 = vmatpush1.msra.mxu0 0.0
  %643 = vmatprep.subr.mxu0 0.0
  %644 = vmatpush1.msra.mxu0 0.0
  %645 = vmatprep.subr.mxu0 0.0
  %646 = vmatpush1.msra.mxu0 0.0
  %647 = vmatprep.subr.mxu0 0.0
  %648 = vmatpush1.msra.mxu0 0.0
  %649 = vmatprep.subr.mxu0 0.0
  %650 = vmatpush1.msra.mxu0 0.0
  %651 = vmatprep.subr.mxu0 0.0
  %652 = vmatpush1.msra.mxu0 0.0
  %653 = vmatprep.mubr.f32.mxu0 0.0
  %v654 = vand.u32 %v42, 4294901760
  %655 = vmatmul.mubr.f32.gmra.mrb[0].mxu0 %v654
  %v656 = vpop.f32.mrb[0].mxu0
  %v657 = vadd.f32 %v527, %v656
  %v658 = vpop.f32.mrb[0].mxu0
  %659 = vmatprep.mubr.f32.mxu0 0.0
  %v660 = vand.u32 %v45, 4294901760
  %661 = vmatmul.mubr.f32.gmra.mrb[0].mxu0 %v660
  %v662 = vpop.f32.mrb[0].mxu0
  %v663 = vadd.f32 %v535, %v662
  %v664 = vpop.f32.mrb[0].mxu0
  %665 = vmatprep.mubr.f32.mxu0 0.0
  %v666 = vand.u32 %v48, 4294901760
  %667 = vmatmul.mubr.f32.gmra.mrb[0].mxu0 %v666
  %v668 = vpop.f32.mrb[0].mxu0
  %v669 = vadd.f32 %v543, %v668
  %v670 = vpop.f32.mrb[0].mxu0
  %671 = vmatprep.mubr.f32.mxu0 0.0
  %v672 = vand.u32 %v51, 4294901760
  %673 = vmatmul.mubr.f32.gmra.mrb[0].mxu0 %v672
  %v674 = vpop.f32.mrb[0].mxu0
  %v675 = vadd.f32 %v551, %v674
  %v676 = vpop.f32.mrb[0].mxu0
  %677 = vmatprep.mubr.f32.mxu0 0.0
  %v678 = vand.u32 %v54, 4294901760
  %679 = vmatmul.mubr.f32.gmra.mrb[0].mxu0 %v678
  %v680 = vpop.f32.mrb[0].mxu0
  %v681 = vadd.f32 %v559, %v680
  %v682 = vpop.f32.mrb[0].mxu0
  %683 = vmatprep.mubr.f32.mxu0 0.0
  %v684 = vand.u32 %v57, 4294901760
  %685 = vmatmul.mubr.f32.gmra.mrb[0].mxu0 %v684
  %v686 = vpop.f32.mrb[0].mxu0
  %v687 = vadd.f32 %v567, %v686
  %v688 = vpop.f32.mrb[0].mxu0
  %689 = vmatprep.mubr.f32.mxu0 0.0
  %v690 = vand.u32 %v60, 4294901760
  %691 = vmatmul.mubr.f32.gmra.mrb[0].mxu0 %v690
  %v692 = vpop.f32.mrb[0].mxu0
  %v693 = vadd.f32 %v575, %v692
  %v694 = vpop.f32.mrb[0].mxu0
  %695 = vmatprep.mubr.f32.mxu0 0.0
  %v696 = vand.u32 %v63, 4294901760
  %697 = vmatmul.mubr.f32.gmra.mrb[0].mxu0 %v696
  %v698 = vpop.f32.mrb[0].mxu0
  %v699 = vadd.f32 %v583, %v698
  %v700 = vpop.f32.mrb[0].mxu0
  %701 = vdwg.mxu0
  %702 = vmatprep.subr.mxu0 0.0
  %v703 = vand.u32 %v67, 4294901760
  %704 = vmatpush1.msra.mxu0 %v703
  %705 = vmatprep.subr.mxu0 0.0
  %706 = vmatpush1.msra.mxu0 0.0
  %707 = vmatprep.subr.mxu0 0.0
  %708 = vmatpush1.msra.mxu0 0.0
  %709 = vmatprep.subr.mxu0 0.0
  %710 = vmatpush1.msra.mxu0 0.0
  %711 = vmatprep.subr.mxu0 0.0
  %712 = vmatpush1.msra.mxu0 0.0
  %713 = vmatprep.subr.mxu0 0.0
  %714 = vmatpush1.msra.mxu0 0.0
  %715 = vmatprep.subr.mxu0 0.0
  %716 = vmatpush1.msra.mxu0 0.0
  %717 = vmatprep.subr.mxu0 0.0
  %718 = vmatpush1.msra.mxu0 0.0
  %719 = vmatprep.subr.mxu0 0.0
  %720 = vmatpush1.msra.mxu0 0.0
  %721 = vmatprep.subr.mxu0 0.0
  %722 = vmatpush1.msra.mxu0 0.0
  %723 = vmatprep.subr.mxu0 0.0
  %724 = vmatpush1.msra.mxu0 0.0
  %725 = vmatprep.subr.mxu0 0.0
  %726 = vmatpush1.msra.mxu0 0.0
  %727 = vmatprep.subr.mxu0 0.0
  %728 = vmatpush1.msra.mxu0 0.0
  %729 = vmatprep.subr.mxu0 0.0
  %730 = vmatpush1.msra.mxu0 0.0
  %731 = vmatprep.subr.mxu0 0.0
  %732 = vmatpush1.msra.mxu0 0.0
  %733 = vmatprep.subr.mxu0 0.0
  %734 = vmatpush1.msra.mxu0 0.0
  %735 = vmatprep.subr.mxu0 0.0
  %736 = vmatpush1.msra.mxu0 0.0
  %737 = vmatprep.subr.mxu0 0.0
  %738 = vmatpush1.msra.mxu0 0.0
  %739 = vmatprep.subr.mxu0 0.0
  %740 = vmatpush1.msra.mxu0 0.0
  %741 = vmatprep.subr.mxu0 0.0
  %742 = vmatpush1.msra.mxu0 0.0
  %743 = vmatprep.subr.mxu0 0.0
  %744 = vmatpush1.msra.mxu0 0.0
  %745 = vmatprep.subr.mxu0 0.0
  %746 = vmatpush1.msra.mxu0 0.0
  %747 = vmatprep.subr.mxu0 0.0
  %748 = vmatpush1.msra.mxu0 0.0
  %749 = vmatprep.subr.mxu0 0.0
  %750 = vmatpush1.msra.mxu0 0.0
  %751 = vmatprep.subr.mxu0 0.0
  %752 = vmatpush1.msra.mxu0 0.0
  %753 = vmatprep.subr.mxu0 0.0
  %754 = vmatpush1.msra.mxu0 0.0
  %755 = vmatprep.subr.mxu0 0.0
  %756 = vmatpush1.msra.mxu0 0.0
  %757 = vmatprep.subr.mxu0 0.0
  %758 = vmatpush1.msra.mxu0 0.0
  %759 = vmatprep.subr.mxu0 0.0
  %760 = vmatpush1.msra.mxu0 0.0
  %761 = vmatprep.subr.mxu0 0.0
  %762 = vmatpush1.msra.mxu0 0.0
  %763 = vmatprep.subr.mxu0 0.0
  %764 = vmatpush1.msra.mxu0 0.0
  %765 = vmatprep.subr.mxu0 0.0
  %766 = vmatpush1.msra.mxu0 0.0
  %767 = vmatprep.mubr.f32.mxu0 0.0
  %v768 = vand.u32 %v42, 4294901760
  %769 = vmatmul.mubr.f32.gmra.mrb[0].mxu0 %v768
  %v770 = vpop.f32.mrb[0].mxu0
  %v771 = vadd.f32 %v657, %v770
  %v772 = vpop.f32.mrb[0].mxu0
  %773 = vmatprep.mubr.f32.mxu0 0.0
  %v774 = vand.u32 %v45, 4294901760
  %775 = vmatmul.mubr.f32.gmra.mrb[0].mxu0 %v774
  %v776 = vpop.f32.mrb[0].mxu0
  %v777 = vadd.f32 %v663, %v776
  %v778 = vpop.f32.mrb[0].mxu0
  %779 = vmatprep.mubr.f32.mxu0 0.0
  %v780 = vand.u32 %v48, 4294901760
  %781 = vmatmul.mubr.f32.gmra.mrb[0].mxu0 %v780
  %v782 = vpop.f32.mrb[0].mxu0
  %v783 = vadd.f32 %v669, %v782
  %v784 = vpop.f32.mrb[0].mxu0
  %785 = vmatprep.mubr.f32.mxu0 0.0
  %v786 = vand.u32 %v51, 4294901760
  %787 = vmatmul.mubr.f32.gmra.mrb[0].mxu0 %v786
  %v788 = vpop.f32.mrb[0].mxu0
  %v789 = vadd.f32 %v675, %v788
  %v790 = vpop.f32.mrb[0].mxu0
  %791 = vmatprep.mubr.f32.mxu0 0.0
  %v792 = vand.u32 %v54, 4294901760
  %793 = vmatmul.mubr.f32.gmra.mrb[0].mxu0 %v792
  %v794 = vpop.f32.mrb[0].mxu0
  %v795 = vadd.f32 %v681, %v794
  %v796 = vpop.f32.mrb[0].mxu0
  %797 = vmatprep.mubr.f32.mxu0 0.0
  %v798 = vand.u32 %v57, 4294901760
  %799 = vmatmul.mubr.f32.gmra.mrb[0].mxu0 %v798
  %v800 = vpop.f32.mrb[0].mxu0
  %v801 = vadd.f32 %v687, %v800
  %v802 = vpop.f32.mrb[0].mxu0
  %803 = vmatprep.mubr.f32.mxu0 0.0
  %v804 = vand.u32 %v60, 4294901760
  %805 = vmatmul.mubr.f32.gmra.mrb[0].mxu0 %v804
  %v806 = vpop.f32.mrb[0].mxu0
  %v807 = vadd.f32 %v693, %v806
  %v808 = vpop.f32.mrb[0].mxu0
  %809 = vmatprep.mubr.f32.mxu0 0.0
  %v810 = vand.u32 %v63, 4294901760
  %811 = vmatmul.mubr.f32.gmra.mrb[0].mxu0 %v810
  %v812 = vpop.f32.mrb[0].mxu0
  %v813 = vadd.f32 %v699, %v812
  %v814 = vpop.f32.mrb[0].mxu0
  %815 = vdwg.mxu0
  %v817 = vsel %vm40, %v20, 0
  %v820 = vsel %vm40, %v21, 0
  %v823 = vsel %vm40, %v22, 0
  %v826 = vsel %vm40, %v23, 0
  %v829 = vsel %vm40, %v24, 0
  %v832 = vsel %vm40, %v25, 0
  %v835 = vsel %vm40, %v26, 0
  %v838 = vsel %vm40, %v27, 0
  %v841 = vsel %vm65, %v28, 0
  %843 = vmatprep.subr.mxu0 0.0
  %v844 = vand.u32 %v841, 4294901760
  %845 = vmatpush1.msra.mxu0 %v844
  %846 = vmatprep.subr.mxu0 0.0
  %847 = vmatpush1.msra.mxu0 0.0
  %848 = vmatprep.subr.mxu0 0.0
  %849 = vmatpush1.msra.mxu0 0.0
  %850 = vmatprep.subr.mxu0 0.0
  %851 = vmatpush1.msra.mxu0 0.0
  %852 = vmatprep.subr.mxu0 0.0
  %853 = vmatpush1.msra.mxu0 0.0
  %854 = vmatprep.subr.mxu0 0.0
  %855 = vmatpush1.msra.mxu0 0.0
  %856 = vmatprep.subr.mxu0 0.0
  %857 = vmatpush1.msra.mxu0 0.0
  %858 = vmatprep.subr.mxu0 0.0
  %859 = vmatpush1.msra.mxu0 0.0
  %860 = vmatprep.subr.mxu0 0.0
  %861 = vmatpush1.msra.mxu0 0.0
  %862 = vmatprep.subr.mxu0 0.0
  %863 = vmatpush1.msra.mxu0 0.0
  %864 = vmatprep.subr.mxu0 0.0
  %865 = vmatpush1.msra.mxu0 0.0
  %866 = vmatprep.subr.mxu0 0.0
  %867 = vmatpush1.msra.mxu0 0.0
  %868 = vmatprep.subr.mxu0 0.0
  %869 = vmatpush1.msra.mxu0 0.0
  %870 = vmatprep.subr.mxu0 0.0
  %871 = vmatpush1.msra.mxu0 0.0
  %872 = vmatprep.subr.mxu0 0.0
  %873 = vmatpush1.msra.mxu0 0.0
  %874 = vmatprep.subr.mxu0 0.0
  %875 = vmatpush1.msra.mxu0 0.0
  %876 = vmatprep.subr.mxu0 0.0
  %877 = vmatpush1.msra.mxu0 0.0
  %878 = vmatprep.subr.mxu0 0.0
  %879 = vmatpush1.msra.mxu0 0.0
  %880 = vmatprep.subr.mxu0 0.0
  %881 = vmatpush1.msra.mxu0 0.0
  %882 = vmatprep.subr.mxu0 0.0
  %883 = vmatpush1.msra.mxu0 0.0
  %884 = vmatprep.subr.mxu0 0.0
  %885 = vmatpush1.msra.mxu0 0.0
  %886 = vmatprep.subr.mxu0 0.0
  %887 = vmatpush1.msra.mxu0 0.0
  %888 = vmatprep.subr.mxu0 0.0
  %889 = vmatpush1.msra.mxu0 0.0
  %890 = vmatprep.subr.mxu0 0.0
  %891 = vmatpush1.msra.mxu0 0.0
  %892 = vmatprep.subr.mxu0 0.0
  %893 = vmatpush1.msra.mxu0 0.0
  %894 = vmatprep.subr.mxu0 0.0
  %895 = vmatpush1.msra.mxu0 0.0
  %896 = vmatprep.subr.mxu0 0.0
  %897 = vmatpush1.msra.mxu0 0.0
  %898 = vmatprep.subr.mxu0 0.0
  %899 = vmatpush1.msra.mxu0 0.0
  %900 = vmatprep.subr.mxu0 0.0
  %901 = vmatpush1.msra.mxu0 0.0
  %902 = vmatprep.subr.mxu0 0.0
  %903 = vmatpush1.msra.mxu0 0.0
  %904 = vmatprep.subr.mxu0 0.0
  %905 = vmatpush1.msra.mxu0 0.0
  %906 = vmatprep.subr.mxu0 0.0
  %907 = vmatpush1.msra.mxu0 0.0
  %908 = vmatprep.mubr.f32.mxu0 0.0
  %v909 = vand.u32 %v817, 4294901760
  %v910 = vsub.f32 %v817, %v909
  %v911 = vand.u32 %v910, 4294901760
  %v912 = vsub.f32 %v910, %v911
  %v913 = vand.u32 %v912, 4294901760
  %914 = vmatmul.mubr.f32.gmra.mrb[0].mxu0 %v913
  %v915 = vpop.f32.mrb[0].mxu0
  %v916 = vadd.f32 %v771, %v915
  %v917 = vpop.f32.mrb[0].mxu0
  %918 = vmatprep.mubr.f32.mxu0 0.0
  %v919 = vand.u32 %v820, 4294901760
  %v920 = vsub.f32 %v820, %v919
  %v921 = vand.u32 %v920, 4294901760
  %v922 = vsub.f32 %v920, %v921
  %v923 = vand.u32 %v922, 4294901760
  %924 = vmatmul.mubr.f32.gmra.mrb[0].mxu0 %v923
  %v925 = vpop.f32.mrb[0].mxu0
  %v926 = vadd.f32 %v777, %v925
  %v927 = vpop.f32.mrb[0].mxu0
  %928 = vmatprep.mubr.f32.mxu0 0.0
  %v929 = vand.u32 %v823, 4294901760
  %v930 = vsub.f32 %v823, %v929
  %v931 = vand.u32 %v930, 4294901760
  %v932 = vsub.f32 %v930, %v931
  %v933 = vand.u32 %v932, 4294901760
  %934 = vmatmul.mubr.f32.gmra.mrb[0].mxu0 %v933
  %v935 = vpop.f32.mrb[0].mxu0
  %v936 = vadd.f32 %v783, %v935
  %v937 = vpop.f32.mrb[0].mxu0
  %938 = vmatprep.mubr.f32.mxu0 0.0
  %v939 = vand.u32 %v826, 4294901760
  %v940 = vsub.f32 %v826, %v939
  %v941 = vand.u32 %v940, 4294901760
  %v942 = vsub.f32 %v940, %v941
  %v943 = vand.u32 %v942, 4294901760
  %944 = vmatmul.mubr.f32.gmra.mrb[0].mxu0 %v943
  %v945 = vpop.f32.mrb[0].mxu0
  %v946 = vadd.f32 %v789, %v945
  %v947 = vpop.f32.mrb[0].mxu0
  %948 = vmatprep.mubr.f32.mxu0 0.0
  %v949 = vand.u32 %v829, 4294901760
  %v950 = vsub.f32 %v829, %v949
  %v951 = vand.u32 %v950, 4294901760
  %v952 = vsub.f32 %v950, %v951
  %v953 = vand.u32 %v952, 4294901760
  %954 = vmatmul.mubr.f32.gmra.mrb[0].mxu0 %v953
  %v955 = vpop.f32.mrb[0].mxu0
  %v956 = vadd.f32 %v795, %v955
  %v957 = vpop.f32.mrb[0].mxu0
  %958 = vmatprep.mubr.f32.mxu0 0.0
  %v959 = vand.u32 %v832, 4294901760
  %v960 = vsub.f32 %v832, %v959
  %v961 = vand.u32 %v960, 4294901760
  %v962 = vsub.f32 %v960, %v961
  %v963 = vand.u32 %v962, 4294901760
  %964 = vmatmul.mubr.f32.gmra.mrb[0].mxu0 %v963
  %v965 = vpop.f32.mrb[0].mxu0
  %v966 = vadd.f32 %v801, %v965
  %v967 = vpop.f32.mrb[0].mxu0
  %968 = vmatprep.mubr.f32.mxu0 0.0
  %v969 = vand.u32 %v835, 4294901760
  %v970 = vsub.f32 %v835, %v969
  %v971 = vand.u32 %v970, 4294901760
  %v972 = vsub.f32 %v970, %v971
  %v973 = vand.u32 %v972, 4294901760
  %974 = vmatmul.mubr.f32.gmra.mrb[0].mxu0 %v973
  %v975 = vpop.f32.mrb[0].mxu0
  %v976 = vadd.f32 %v807, %v975
  %v977 = vpop.f32.mrb[0].mxu0
  %978 = vmatprep.mubr.f32.mxu0 0.0
  %v979 = vand.u32 %v838, 4294901760
  %v980 = vsub.f32 %v838, %v979
  %v981 = vand.u32 %v980, 4294901760
  %v982 = vsub.f32 %v980, %v981
  %v983 = vand.u32 %v982, 4294901760
  %984 = vmatmul.mubr.f32.gmra.mrb[0].mxu0 %v983
  %v985 = vpop.f32.mrb[0].mxu0
  %v986 = vadd.f32 %v813, %v985
  %v987 = vpop.f32.mrb[0].mxu0
  %988 = vdwg.mxu0
  %989 = vmatprep.subr.mxu0 0.0
  %v990 = vand.u32 %v841, 4294901760
  %v991 = vsub.f32 %v841, %v990
  %v992 = vand.u32 %v991, 4294901760
  %v993 = vsub.f32 %v991, %v992
  %v994 = vand.u32 %v993, 4294901760
  %995 = vmatpush1.msra.mxu0 %v994
  %996 = vmatprep.subr.mxu0 0.0
  %997 = vmatpush1.msra.mxu0 0.0
  %998 = vmatprep.subr.mxu0 0.0
  %999 = vmatpush1.msra.mxu0 0.0
  %1000 = vmatprep.subr.mxu0 0.0
  %1001 = vmatpush1.msra.mxu0 0.0
  %1002 = vmatprep.subr.mxu0 0.0
  %1003 = vmatpush1.msra.mxu0 0.0
  %1004 = vmatprep.subr.mxu0 0.0
  %1005 = vmatpush1.msra.mxu0 0.0
  %1006 = vmatprep.subr.mxu0 0.0
  %1007 = vmatpush1.msra.mxu0 0.0
  %1008 = vmatprep.subr.mxu0 0.0
  %1009 = vmatpush1.msra.mxu0 0.0
  %1010 = vmatprep.subr.mxu0 0.0
  %1011 = vmatpush1.msra.mxu0 0.0
  %1012 = vmatprep.subr.mxu0 0.0
  %1013 = vmatpush1.msra.mxu0 0.0
  %1014 = vmatprep.subr.mxu0 0.0
  %1015 = vmatpush1.msra.mxu0 0.0
  %1016 = vmatprep.subr.mxu0 0.0
  %1017 = vmatpush1.msra.mxu0 0.0
  %1018 = vmatprep.subr.mxu0 0.0
  %1019 = vmatpush1.msra.mxu0 0.0
  %1020 = vmatprep.subr.mxu0 0.0
  %1021 = vmatpush1.msra.mxu0 0.0
  %1022 = vmatprep.subr.mxu0 0.0
  %1023 = vmatpush1.msra.mxu0 0.0
  %1024 = vmatprep.subr.mxu0 0.0
  %1025 = vmatpush1.msra.mxu0 0.0
  %1026 = vmatprep.subr.mxu0 0.0
  %1027 = vmatpush1.msra.mxu0 0.0
  %1028 = vmatprep.subr.mxu0 0.0
  %1029 = vmatpush1.msra.mxu0 0.0
  %1030 = vmatprep.subr.mxu0 0.0
  %1031 = vmatpush1.msra.mxu0 0.0
  %1032 = vmatprep.subr.mxu0 0.0
  %1033 = vmatpush1.msra.mxu0 0.0
  %1034 = vmatprep.subr.mxu0 0.0
  %1035 = vmatpush1.msra.mxu0 0.0
  %1036 = vmatprep.subr.mxu0 0.0
  %1037 = vmatpush1.msra.mxu0 0.0
  %1038 = vmatprep.subr.mxu0 0.0
  %1039 = vmatpush1.msra.mxu0 0.0
  %1040 = vmatprep.subr.mxu0 0.0
  %1041 = vmatpush1.msra.mxu0 0.0
  %1042 = vmatprep.subr.mxu0 0.0
  %1043 = vmatpush1.msra.mxu0 0.0
  %1044 = vmatprep.subr.mxu0 0.0
  %1045 = vmatpush1.msra.mxu0 0.0
  %1046 = vmatprep.subr.mxu0 0.0
  %1047 = vmatpush1.msra.mxu0 0.0
  %1048 = vmatprep.subr.mxu0 0.0
  %1049 = vmatpush1.msra.mxu0 0.0
  %1050 = vmatprep.subr.mxu0 0.0
  %1051 = vmatpush1.msra.mxu0 0.0
  %1052 = vmatprep.subr.mxu0 0.0
  %1053 = vmatpush1.msra.mxu0 0.0
  %1054 = vmatprep.subr.mxu0 0.0
  %1055 = vmatpush1.msra.mxu0 0.0
  %1056 = vmatprep.subr.mxu0 0.0
  %1057 = vmatpush1.msra.mxu0 0.0
  %1058 = vmatprep.mubr.f32.mxu0 0.0
  %v1059 = vand.u32 %v817, 4294901760
  %1060 = vmatmul.mubr.f32.gmra.mrb[0].mxu0 %v1059
  %v1061 = vpop.f32.mrb[0].mxu0
  %v1062 = vadd.f32 %v916, %v1061
  %v1063 = vpop.f32.mrb[0].mxu0
  %1064 = vmatprep.mubr.f32.mxu0 0.0
  %v1065 = vand.u32 %v820, 4294901760
  %1066 = vmatmul.mubr.f32.gmra.mrb[0].mxu0 %v1065
  %v1067 = vpop.f32.mrb[0].mxu0
  %v1068 = vadd.f32 %v926, %v1067
  %v1069 = vpop.f32.mrb[0].mxu0
  %1070 = vmatprep.mubr.f32.mxu0 0.0
  %v1071 = vand.u32 %v823, 4294901760
  %1072 = vmatmul.mubr.f32.gmra.mrb[0].mxu0 %v1071
  %v1073 = vpop.f32.mrb[0].mxu0
  %v1074 = vadd.f32 %v936, %v1073
  %v1075 = vpop.f32.mrb[0].mxu0
  %1076 = vmatprep.mubr.f32.mxu0 0.0
  %v1077 = vand.u32 %v826, 4294901760
  %1078 = vmatmul.mubr.f32.gmra.mrb[0].mxu0 %v1077
  %v1079 = vpop.f32.mrb[0].mxu0
  %v1080 = vadd.f32 %v946, %v1079
  %v1081 = vpop.f32.mrb[0].mxu0
  %1082 = vmatprep.mubr.f32.mxu0 0.0
  %v1083 = vand.u32 %v829, 4294901760
  %1084 = vmatmul.mubr.f32.gmra.mrb[0].mxu0 %v1083
  %v1085 = vpop.f32.mrb[0].mxu0
  %v1086 = vadd.f32 %v956, %v1085
  %v1087 = vpop.f32.mrb[0].mxu0
  %1088 = vmatprep.mubr.f32.mxu0 0.0
  %v1089 = vand.u32 %v832, 4294901760
  %1090 = vmatmul.mubr.f32.gmra.mrb[0].mxu0 %v1089
  %v1091 = vpop.f32.mrb[0].mxu0
  %v1092 = vadd.f32 %v966, %v1091
  %v1093 = vpop.f32.mrb[0].mxu0
  %1094 = vmatprep.mubr.f32.mxu0 0.0
  %v1095 = vand.u32 %v835, 4294901760
  %1096 = vmatmul.mubr.f32.gmra.mrb[0].mxu0 %v1095
  %v1097 = vpop.f32.mrb[0].mxu0
  %v1098 = vadd.f32 %v976, %v1097
  %v1099 = vpop.f32.mrb[0].mxu0
  %1100 = vmatprep.mubr.f32.mxu0 0.0
  %v1101 = vand.u32 %v838, 4294901760
  %1102 = vmatmul.mubr.f32.gmra.mrb[0].mxu0 %v1101
  %v1103 = vpop.f32.mrb[0].mxu0
  %v1104 = vadd.f32 %v986, %v1103
  %v1105 = vpop.f32.mrb[0].mxu0
  %1106 = vdwg.mxu0
  %1107 = vmatprep.subr.mxu0 0.0
  %v1108 = vand.u32 %v841, 4294901760
  %v1109 = vsub.f32 %v841, %v1108
  %1110 = vmatpush1.msra.mxu0 %v1109
  %1111 = vmatprep.subr.mxu0 0.0
  %1112 = vmatpush1.msra.mxu0 0.0
  %1113 = vmatprep.subr.mxu0 0.0
  %1114 = vmatpush1.msra.mxu0 0.0
  %1115 = vmatprep.subr.mxu0 0.0
  %1116 = vmatpush1.msra.mxu0 0.0
  %1117 = vmatprep.subr.mxu0 0.0
  %1118 = vmatpush1.msra.mxu0 0.0
  %1119 = vmatprep.subr.mxu0 0.0
  %1120 = vmatpush1.msra.mxu0 0.0
  %1121 = vmatprep.subr.mxu0 0.0
  %1122 = vmatpush1.msra.mxu0 0.0
  %1123 = vmatprep.subr.mxu0 0.0
  %1124 = vmatpush1.msra.mxu0 0.0
  %1125 = vmatprep.subr.mxu0 0.0
  %1126 = vmatpush1.msra.mxu0 0.0
  %1127 = vmatprep.subr.mxu0 0.0
  %1128 = vmatpush1.msra.mxu0 0.0
  %1129 = vmatprep.subr.mxu0 0.0
  %1130 = vmatpush1.msra.mxu0 0.0
  %1131 = vmatprep.subr.mxu0 0.0
  %1132 = vmatpush1.msra.mxu0 0.0
  %1133 = vmatprep.subr.mxu0 0.0
  %1134 = vmatpush1.msra.mxu0 0.0
  %1135 = vmatprep.subr.mxu0 0.0
  %1136 = vmatpush1.msra.mxu0 0.0
  %1137 = vmatprep.subr.mxu0 0.0
  %1138 = vmatpush1.msra.mxu0 0.0
  %1139 = vmatprep.subr.mxu0 0.0
  %1140 = vmatpush1.msra.mxu0 0.0
  %1141 = vmatprep.subr.mxu0 0.0
  %1142 = vmatpush1.msra.mxu0 0.0
  %1143 = vmatprep.subr.mxu0 0.0
  %1144 = vmatpush1.msra.mxu0 0.0
  %1145 = vmatprep.subr.mxu0 0.0
  %1146 = vmatpush1.msra.mxu0 0.0
  %1147 = vmatprep.subr.mxu0 0.0
  %1148 = vmatpush1.msra.mxu0 0.0
  %1149 = vmatprep.subr.mxu0 0.0
  %1150 = vmatpush1.msra.mxu0 0.0
  %1151 = vmatprep.subr.mxu0 0.0
  %1152 = vmatpush1.msra.mxu0 0.0
  %1153 = vmatprep.subr.mxu0 0.0
  %1154 = vmatpush1.msra.mxu0 0.0
  %1155 = vmatprep.subr.mxu0 0.0
  %1156 = vmatpush1.msra.mxu0 0.0
  %1157 = vmatprep.subr.mxu0 0.0
  %1158 = vmatpush1.msra.mxu0 0.0
  %1159 = vmatprep.subr.mxu0 0.0
  %1160 = vmatpush1.msra.mxu0 0.0
  %1161 = vmatprep.subr.mxu0 0.0
  %1162 = vmatpush1.msra.mxu0 0.0
  %1163 = vmatprep.subr.mxu0 0.0
  %1164 = vmatpush1.msra.mxu0 0.0
  %1165 = vmatprep.subr.mxu0 0.0
  %1166 = vmatpush1.msra.mxu0 0.0
  %1167 = vmatprep.subr.mxu0 0.0
  %1168 = vmatpush1.msra.mxu0 0.0
  %1169 = vmatprep.subr.mxu0 0.0
  %1170 = vmatpush1.msra.mxu0 0.0
  %1171 = vmatprep.subr.mxu0 0.0
  %1172 = vmatpush1.msra.mxu0 0.0
  %1173 = vmatprep.mubr.f32.mxu0 0.0
  %v1174 = vand.u32 %v817, 4294901760
  %v1175 = vsub.f32 %v817, %v1174
  %1176 = vmatmul.mubr.f32.gmra.mrb[0].mxu0 %v1175
  %v1177 = vpop.f32.mrb[0].mxu0
  %v1178 = vadd.f32 %v1062, %v1177
  %v1179 = vpop.f32.mrb[0].mxu0
  %1180 = vmatprep.mubr.f32.mxu0 0.0
  %v1181 = vand.u32 %v820, 4294901760
  %v1182 = vsub.f32 %v820, %v1181
  %1183 = vmatmul.mubr.f32.gmra.mrb[0].mxu0 %v1182
  %v1184 = vpop.f32.mrb[0].mxu0
  %v1185 = vadd.f32 %v1068, %v1184
  %v1186 = vpop.f32.mrb[0].mxu0
  %1187 = vmatprep.mubr.f32.mxu0 0.0
  %v1188 = vand.u32 %v823, 4294901760
  %v1189 = vsub.f32 %v823, %v1188
  %1190 = vmatmul.mubr.f32.gmra.mrb[0].mxu0 %v1189
  %v1191 = vpop.f32.mrb[0].mxu0
  %v1192 = vadd.f32 %v1074, %v1191
  %v1193 = vpop.f32.mrb[0].mxu0
  %1194 = vmatprep.mubr.f32.mxu0 0.0
  %v1195 = vand.u32 %v826, 4294901760
  %v1196 = vsub.f32 %v826, %v1195
  %1197 = vmatmul.mubr.f32.gmra.mrb[0].mxu0 %v1196
  %v1198 = vpop.f32.mrb[0].mxu0
  %v1199 = vadd.f32 %v1080, %v1198
  %v1200 = vpop.f32.mrb[0].mxu0
  %1201 = vmatprep.mubr.f32.mxu0 0.0
  %v1202 = vand.u32 %v829, 4294901760
  %v1203 = vsub.f32 %v829, %v1202
  %1204 = vmatmul.mubr.f32.gmra.mrb[0].mxu0 %v1203
  %v1205 = vpop.f32.mrb[0].mxu0
  %v1206 = vadd.f32 %v1086, %v1205
  %v1207 = vpop.f32.mrb[0].mxu0
  %1208 = vmatprep.mubr.f32.mxu0 0.0
  %v1209 = vand.u32 %v832, 4294901760
  %v1210 = vsub.f32 %v832, %v1209
  %1211 = vmatmul.mubr.f32.gmra.mrb[0].mxu0 %v1210
  %v1212 = vpop.f32.mrb[0].mxu0
  %v1213 = vadd.f32 %v1092, %v1212
  %v1214 = vpop.f32.mrb[0].mxu0
  %1215 = vmatprep.mubr.f32.mxu0 0.0
  %v1216 = vand.u32 %v835, 4294901760
  %v1217 = vsub.f32 %v835, %v1216
  %1218 = vmatmul.mubr.f32.gmra.mrb[0].mxu0 %v1217
  %v1219 = vpop.f32.mrb[0].mxu0
  %v1220 = vadd.f32 %v1098, %v1219
  %v1221 = vpop.f32.mrb[0].mxu0
  %1222 = vmatprep.mubr.f32.mxu0 0.0
  %v1223 = vand.u32 %v838, 4294901760
  %v1224 = vsub.f32 %v838, %v1223
  %1225 = vmatmul.mubr.f32.gmra.mrb[0].mxu0 %v1224
  %v1226 = vpop.f32.mrb[0].mxu0
  %v1227 = vadd.f32 %v1104, %v1226
  %v1228 = vpop.f32.mrb[0].mxu0
  %1229 = vdwg.mxu0
  %1230 = vmatprep.subr.mxu0 0.0
  %v1231 = vand.u32 %v841, 4294901760
  %1232 = vmatpush1.msra.mxu0 %v1231
  %1233 = vmatprep.subr.mxu0 0.0
  %1234 = vmatpush1.msra.mxu0 0.0
  %1235 = vmatprep.subr.mxu0 0.0
  %1236 = vmatpush1.msra.mxu0 0.0
  %1237 = vmatprep.subr.mxu0 0.0
  %1238 = vmatpush1.msra.mxu0 0.0
  %1239 = vmatprep.subr.mxu0 0.0
  %1240 = vmatpush1.msra.mxu0 0.0
  %1241 = vmatprep.subr.mxu0 0.0
  %1242 = vmatpush1.msra.mxu0 0.0
  %1243 = vmatprep.subr.mxu0 0.0
  %1244 = vmatpush1.msra.mxu0 0.0
  %1245 = vmatprep.subr.mxu0 0.0
  %1246 = vmatpush1.msra.mxu0 0.0
  %1247 = vmatprep.subr.mxu0 0.0
  %1248 = vmatpush1.msra.mxu0 0.0
  %1249 = vmatprep.subr.mxu0 0.0
  %1250 = vmatpush1.msra.mxu0 0.0
  %1251 = vmatprep.subr.mxu0 0.0
  %1252 = vmatpush1.msra.mxu0 0.0
  %1253 = vmatprep.subr.mxu0 0.0
  %1254 = vmatpush1.msra.mxu0 0.0
  %1255 = vmatprep.subr.mxu0 0.0
  %1256 = vmatpush1.msra.mxu0 0.0
  %1257 = vmatprep.subr.mxu0 0.0
  %1258 = vmatpush1.msra.mxu0 0.0
  %1259 = vmatprep.subr.mxu0 0.0
  %1260 = vmatpush1.msra.mxu0 0.0
  %1261 = vmatprep.subr.mxu0 0.0
  %1262 = vmatpush1.msra.mxu0 0.0
  %1263 = vmatprep.subr.mxu0 0.0
  %1264 = vmatpush1.msra.mxu0 0.0
  %1265 = vmatprep.subr.mxu0 0.0
  %1266 = vmatpush1.msra.mxu0 0.0
  %1267 = vmatprep.subr.mxu0 0.0
  %1268 = vmatpush1.msra.mxu0 0.0
  %1269 = vmatprep.subr.mxu0 0.0
  %1270 = vmatpush1.msra.mxu0 0.0
  %1271 = vmatprep.subr.mxu0 0.0
  %1272 = vmatpush1.msra.mxu0 0.0
  %1273 = vmatprep.subr.mxu0 0.0
  %1274 = vmatpush1.msra.mxu0 0.0
  %1275 = vmatprep.subr.mxu0 0.0
  %1276 = vmatpush1.msra.mxu0 0.0
  %1277 = vmatprep.subr.mxu0 0.0
  %1278 = vmatpush1.msra.mxu0 0.0
  %1279 = vmatprep.subr.mxu0 0.0
  %1280 = vmatpush1.msra.mxu0 0.0
  %1281 = vmatprep.subr.mxu0 0.0
  %1282 = vmatpush1.msra.mxu0 0.0
  %1283 = vmatprep.subr.mxu0 0.0
  %1284 = vmatpush1.msra.mxu0 0.0
  %1285 = vmatprep.subr.mxu0 0.0
  %1286 = vmatpush1.msra.mxu0 0.0
  %1287 = vmatprep.subr.mxu0 0.0
  %1288 = vmatpush1.msra.mxu0 0.0
  %1289 = vmatprep.subr.mxu0 0.0
  %1290 = vmatpush1.msra.mxu0 0.0
  %1291 = vmatprep.subr.mxu0 0.0
  %1292 = vmatpush1.msra.mxu0 0.0
  %1293 = vmatprep.subr.mxu0 0.0
  %1294 = vmatpush1.msra.mxu0 0.0
  %1295 = vmatprep.mubr.f32.mxu0 0.0
  %v1296 = vand.u32 %v817, 4294901760
  %v1297 = vsub.f32 %v817, %v1296
  %v1298 = vand.u32 %v1297, 4294901760
  %1299 = vmatmul.mubr.f32.gmra.mrb[0].mxu0 %v1298
  %v1300 = vpop.f32.mrb[0].mxu0
  %v1301 = vadd.f32 %v1178, %v1300
  %v1302 = vpop.f32.mrb[0].mxu0
  %1303 = vmatprep.mubr.f32.mxu0 0.0
  %v1304 = vand.u32 %v820, 4294901760
  %v1305 = vsub.f32 %v820, %v1304
  %v1306 = vand.u32 %v1305, 4294901760
  %1307 = vmatmul.mubr.f32.gmra.mrb[0].mxu0 %v1306
  %v1308 = vpop.f32.mrb[0].mxu0
  %v1309 = vadd.f32 %v1185, %v1308
  %v1310 = vpop.f32.mrb[0].mxu0
  %1311 = vmatprep.mubr.f32.mxu0 0.0
  %v1312 = vand.u32 %v823, 4294901760
  %v1313 = vsub.f32 %v823, %v1312
  %v1314 = vand.u32 %v1313, 4294901760
  %1315 = vmatmul.mubr.f32.gmra.mrb[0].mxu0 %v1314
  %v1316 = vpop.f32.mrb[0].mxu0
  %v1317 = vadd.f32 %v1192, %v1316
  %v1318 = vpop.f32.mrb[0].mxu0
  %1319 = vmatprep.mubr.f32.mxu0 0.0
  %v1320 = vand.u32 %v826, 4294901760
  %v1321 = vsub.f32 %v826, %v1320
  %v1322 = vand.u32 %v1321, 4294901760
  %1323 = vmatmul.mubr.f32.gmra.mrb[0].mxu0 %v1322
  %v1324 = vpop.f32.mrb[0].mxu0
  %v1325 = vadd.f32 %v1199, %v1324
  %v1326 = vpop.f32.mrb[0].mxu0
  %1327 = vmatprep.mubr.f32.mxu0 0.0
  %v1328 = vand.u32 %v829, 4294901760
  %v1329 = vsub.f32 %v829, %v1328
  %v1330 = vand.u32 %v1329, 4294901760
  %1331 = vmatmul.mubr.f32.gmra.mrb[0].mxu0 %v1330
  %v1332 = vpop.f32.mrb[0].mxu0
  %v1333 = vadd.f32 %v1206, %v1332
  %v1334 = vpop.f32.mrb[0].mxu0
  %1335 = vmatprep.mubr.f32.mxu0 0.0
  %v1336 = vand.u32 %v832, 4294901760
  %v1337 = vsub.f32 %v832, %v1336
  %v1338 = vand.u32 %v1337, 4294901760
  %1339 = vmatmul.mubr.f32.gmra.mrb[0].mxu0 %v1338
  %v1340 = vpop.f32.mrb[0].mxu0
  %v1341 = vadd.f32 %v1213, %v1340
  %v1342 = vpop.f32.mrb[0].mxu0
  %1343 = vmatprep.mubr.f32.mxu0 0.0
  %v1344 = vand.u32 %v835, 4294901760
  %v1345 = vsub.f32 %v835, %v1344
  %v1346 = vand.u32 %v1345, 4294901760
  %1347 = vmatmul.mubr.f32.gmra.mrb[0].mxu0 %v1346
  %v1348 = vpop.f32.mrb[0].mxu0
  %v1349 = vadd.f32 %v1220, %v1348
  %v1350 = vpop.f32.mrb[0].mxu0
  %1351 = vmatprep.mubr.f32.mxu0 0.0
  %v1352 = vand.u32 %v838, 4294901760
  %v1353 = vsub.f32 %v838, %v1352
  %v1354 = vand.u32 %v1353, 4294901760
  %1355 = vmatmul.mubr.f32.gmra.mrb[0].mxu0 %v1354
  %v1356 = vpop.f32.mrb[0].mxu0
  %v1357 = vadd.f32 %v1227, %v1356
  %v1358 = vpop.f32.mrb[0].mxu0
  %1359 = vdwg.mxu0
  %1360 = vmatprep.subr.mxu0 0.0
  %v1361 = vand.u32 %v841, 4294901760
  %v1362 = vsub.f32 %v841, %v1361
  %v1363 = vand.u32 %v1362, 4294901760
  %1364 = vmatpush1.msra.mxu0 %v1363
  %1365 = vmatprep.subr.mxu0 0.0
  %1366 = vmatpush1.msra.mxu0 0.0
  %1367 = vmatprep.subr.mxu0 0.0
  %1368 = vmatpush1.msra.mxu0 0.0
  %1369 = vmatprep.subr.mxu0 0.0
  %1370 = vmatpush1.msra.mxu0 0.0
  %1371 = vmatprep.subr.mxu0 0.0
  %1372 = vmatpush1.msra.mxu0 0.0
  %1373 = vmatprep.subr.mxu0 0.0
  %1374 = vmatpush1.msra.mxu0 0.0
  %1375 = vmatprep.subr.mxu0 0.0
  %1376 = vmatpush1.msra.mxu0 0.0
  %1377 = vmatprep.subr.mxu0 0.0
  %1378 = vmatpush1.msra.mxu0 0.0
  %1379 = vmatprep.subr.mxu0 0.0
  %1380 = vmatpush1.msra.mxu0 0.0
  %1381 = vmatprep.subr.mxu0 0.0
  %1382 = vmatpush1.msra.mxu0 0.0
  %1383 = vmatprep.subr.mxu0 0.0
  %1384 = vmatpush1.msra.mxu0 0.0
  %1385 = vmatprep.subr.mxu0 0.0
  %1386 = vmatpush1.msra.mxu0 0.0
  %1387 = vmatprep.subr.mxu0 0.0
  %1388 = vmatpush1.msra.mxu0 0.0
  %1389 = vmatprep.subr.mxu0 0.0
  %1390 = vmatpush1.msra.mxu0 0.0
  %1391 = vmatprep.subr.mxu0 0.0
  %1392 = vmatpush1.msra.mxu0 0.0
  %1393 = vmatprep.subr.mxu0 0.0
  %1394 = vmatpush1.msra.mxu0 0.0
  %1395 = vmatprep.subr.mxu0 0.0
  %1396 = vmatpush1.msra.mxu0 0.0
  %1397 = vmatprep.subr.mxu0 0.0
  %1398 = vmatpush1.msra.mxu0 0.0
  %1399 = vmatprep.subr.mxu0 0.0
  %1400 = vmatpush1.msra.mxu0 0.0
  %1401 = vmatprep.subr.mxu0 0.0
  %1402 = vmatpush1.msra.mxu0 0.0
  %1403 = vmatprep.subr.mxu0 0.0
  %1404 = vmatpush1.msra.mxu0 0.0
  %1405 = vmatprep.subr.mxu0 0.0
  %1406 = vmatpush1.msra.mxu0 0.0
  %1407 = vmatprep.subr.mxu0 0.0
  %1408 = vmatpush1.msra.mxu0 0.0
  %1409 = vmatprep.subr.mxu0 0.0
  %1410 = vmatpush1.msra.mxu0 0.0
  %1411 = vmatprep.subr.mxu0 0.0
  %1412 = vmatpush1.msra.mxu0 0.0
  %1413 = vmatprep.subr.mxu0 0.0
  %1414 = vmatpush1.msra.mxu0 0.0
  %1415 = vmatprep.subr.mxu0 0.0
  %1416 = vmatpush1.msra.mxu0 0.0
  %1417 = vmatprep.subr.mxu0 0.0
  %1418 = vmatpush1.msra.mxu0 0.0
  %1419 = vmatprep.subr.mxu0 0.0
  %1420 = vmatpush1.msra.mxu0 0.0
  %1421 = vmatprep.subr.mxu0 0.0
  %1422 = vmatpush1.msra.mxu0 0.0
  %1423 = vmatprep.subr.mxu0 0.0
  %1424 = vmatpush1.msra.mxu0 0.0
  %1425 = vmatprep.subr.mxu0 0.0
  %1426 = vmatpush1.msra.mxu0 0.0
  %1427 = vmatprep.mubr.f32.mxu0 0.0
  %v1428 = vand.u32 %v817, 4294901760
  %1429 = vmatmul.mubr.f32.gmra.mrb[0].mxu0 %v1428
  %v1430 = vpop.f32.mrb[0].mxu0
  %v1431 = vadd.f32 %v1301, %v1430
  %v1432 = vpop.f32.mrb[0].mxu0
  %1433 = vmatprep.mubr.f32.mxu0 0.0
  %v1434 = vand.u32 %v820, 4294901760
  %1435 = vmatmul.mubr.f32.gmra.mrb[0].mxu0 %v1434
  %v1436 = vpop.f32.mrb[0].mxu0
  %v1437 = vadd.f32 %v1309, %v1436
  %v1438 = vpop.f32.mrb[0].mxu0
  %1439 = vmatprep.mubr.f32.mxu0 0.0
  %v1440 = vand.u32 %v823, 4294901760
  %1441 = vmatmul.mubr.f32.gmra.mrb[0].mxu0 %v1440
  %v1442 = vpop.f32.mrb[0].mxu0
  %v1443 = vadd.f32 %v1317, %v1442
  %v1444 = vpop.f32.mrb[0].mxu0
  %1445 = vmatprep.mubr.f32.mxu0 0.0
  %v1446 = vand.u32 %v826, 4294901760
  %1447 = vmatmul.mubr.f32.gmra.mrb[0].mxu0 %v1446
  %v1448 = vpop.f32.mrb[0].mxu0
  %v1449 = vadd.f32 %v1325, %v1448
  %v1450 = vpop.f32.mrb[0].mxu0
  %1451 = vmatprep.mubr.f32.mxu0 0.0
  %v1452 = vand.u32 %v829, 4294901760
  %1453 = vmatmul.mubr.f32.gmra.mrb[0].mxu0 %v1452
  %v1454 = vpop.f32.mrb[0].mxu0
  %v1455 = vadd.f32 %v1333, %v1454
  %v1456 = vpop.f32.mrb[0].mxu0
  %1457 = vmatprep.mubr.f32.mxu0 0.0
  %v1458 = vand.u32 %v832, 4294901760
  %1459 = vmatmul.mubr.f32.gmra.mrb[0].mxu0 %v1458
  %v1460 = vpop.f32.mrb[0].mxu0
  %v1461 = vadd.f32 %v1341, %v1460
  %v1462 = vpop.f32.mrb[0].mxu0
  %1463 = vmatprep.mubr.f32.mxu0 0.0
  %v1464 = vand.u32 %v835, 4294901760
  %1465 = vmatmul.mubr.f32.gmra.mrb[0].mxu0 %v1464
  %v1466 = vpop.f32.mrb[0].mxu0
  %v1467 = vadd.f32 %v1349, %v1466
  %v1468 = vpop.f32.mrb[0].mxu0
  %1469 = vmatprep.mubr.f32.mxu0 0.0
  %v1470 = vand.u32 %v838, 4294901760
  %1471 = vmatmul.mubr.f32.gmra.mrb[0].mxu0 %v1470
  %v1472 = vpop.f32.mrb[0].mxu0
  %v1473 = vadd.f32 %v1357, %v1472
  %v1474 = vpop.f32.mrb[0].mxu0
  %1475 = vdwg.mxu0
  %1476 = vmatprep.subr.mxu0 0.0
  %v1477 = vand.u32 %v841, 4294901760
  %1478 = vmatpush1.msra.mxu0 %v1477
  %1479 = vmatprep.subr.mxu0 0.0
  %1480 = vmatpush1.msra.mxu0 0.0
  %1481 = vmatprep.subr.mxu0 0.0
  %1482 = vmatpush1.msra.mxu0 0.0
  %1483 = vmatprep.subr.mxu0 0.0
  %1484 = vmatpush1.msra.mxu0 0.0
  %1485 = vmatprep.subr.mxu0 0.0
  %1486 = vmatpush1.msra.mxu0 0.0
  %1487 = vmatprep.subr.mxu0 0.0
  %1488 = vmatpush1.msra.mxu0 0.0
  %1489 = vmatprep.subr.mxu0 0.0
  %1490 = vmatpush1.msra.mxu0 0.0
  %1491 = vmatprep.subr.mxu0 0.0
  %1492 = vmatpush1.msra.mxu0 0.0
  %1493 = vmatprep.subr.mxu0 0.0
  %1494 = vmatpush1.msra.mxu0 0.0
  %1495 = vmatprep.subr.mxu0 0.0
  %1496 = vmatpush1.msra.mxu0 0.0
  %1497 = vmatprep.subr.mxu0 0.0
  %1498 = vmatpush1.msra.mxu0 0.0
  %1499 = vmatprep.subr.mxu0 0.0
  %1500 = vmatpush1.msra.mxu0 0.0
  %1501 = vmatprep.subr.mxu0 0.0
  %1502 = vmatpush1.msra.mxu0 0.0
  %1503 = vmatprep.subr.mxu0 0.0
  %1504 = vmatpush1.msra.mxu0 0.0
  %1505 = vmatprep.subr.mxu0 0.0
  %1506 = vmatpush1.msra.mxu0 0.0
  %1507 = vmatprep.subr.mxu0 0.0
  %1508 = vmatpush1.msra.mxu0 0.0
  %1509 = vmatprep.subr.mxu0 0.0
  %1510 = vmatpush1.msra.mxu0 0.0
  %1511 = vmatprep.subr.mxu0 0.0
  %1512 = vmatpush1.msra.mxu0 0.0
  %1513 = vmatprep.subr.mxu0 0.0
  %1514 = vmatpush1.msra.mxu0 0.0
  %1515 = vmatprep.subr.mxu0 0.0
  %1516 = vmatpush1.msra.mxu0 0.0
  %1517 = vmatprep.subr.mxu0 0.0
  %1518 = vmatpush1.msra.mxu0 0.0
  %1519 = vmatprep.subr.mxu0 0.0
  %1520 = vmatpush1.msra.mxu0 0.0
  %1521 = vmatprep.subr.mxu0 0.0
  %1522 = vmatpush1.msra.mxu0 0.0
  %1523 = vmatprep.subr.mxu0 0.0
  %1524 = vmatpush1.msra.mxu0 0.0
  %1525 = vmatprep.subr.mxu0 0.0
  %1526 = vmatpush1.msra.mxu0 0.0
  %1527 = vmatprep.subr.mxu0 0.0
  %1528 = vmatpush1.msra.mxu0 0.0
  %1529 = vmatprep.subr.mxu0 0.0
  %1530 = vmatpush1.msra.mxu0 0.0
  %1531 = vmatprep.subr.mxu0 0.0
  %1532 = vmatpush1.msra.mxu0 0.0
  %1533 = vmatprep.subr.mxu0 0.0
  %1534 = vmatpush1.msra.mxu0 0.0
  %1535 = vmatprep.subr.mxu0 0.0
  %1536 = vmatpush1.msra.mxu0 0.0
  %1537 = vmatprep.subr.mxu0 0.0
  %1538 = vmatpush1.msra.mxu0 0.0
  %1539 = vmatprep.subr.mxu0 0.0
  %1540 = vmatpush1.msra.mxu0 0.0
  %1541 = vmatprep.mubr.f32.mxu0 0.0
  %v1542 = vand.u32 %v817, 4294901760
  %1543 = vmatmul.mubr.f32.gmra.mrb[0].mxu0 %v1542
  %v1544 = vpop.f32.mrb[0].mxu0
  %v1545 = vadd.f32 %v1431, %v1544
  %v1546 = vpop.f32.mrb[0].mxu0
  %1547 = vmatprep.mubr.f32.mxu0 0.0
  %v1548 = vand.u32 %v820, 4294901760
  %1549 = vmatmul.mubr.f32.gmra.mrb[0].mxu0 %v1548
  %v1550 = vpop.f32.mrb[0].mxu0
  %v1551 = vadd.f32 %v1437, %v1550
  %v1552 = vpop.f32.mrb[0].mxu0
  %1553 = vmatprep.mubr.f32.mxu0 0.0
  %v1554 = vand.u32 %v823, 4294901760
  %1555 = vmatmul.mubr.f32.gmra.mrb[0].mxu0 %v1554
  %v1556 = vpop.f32.mrb[0].mxu0
  %v1557 = vadd.f32 %v1443, %v1556
  %v1558 = vpop.f32.mrb[0].mxu0
  %1559 = vmatprep.mubr.f32.mxu0 0.0
  %v1560 = vand.u32 %v826, 4294901760
  %1561 = vmatmul.mubr.f32.gmra.mrb[0].mxu0 %v1560
  %v1562 = vpop.f32.mrb[0].mxu0
  %v1563 = vadd.f32 %v1449, %v1562
  %v1564 = vpop.f32.mrb[0].mxu0
  %1565 = vmatprep.mubr.f32.mxu0 0.0
  %v1566 = vand.u32 %v829, 4294901760
  %1567 = vmatmul.mubr.f32.gmra.mrb[0].mxu0 %v1566
  %v1568 = vpop.f32.mrb[0].mxu0
  %v1569 = vadd.f32 %v1455, %v1568
  %v1570 = vpop.f32.mrb[0].mxu0
  %1571 = vmatprep.mubr.f32.mxu0 0.0
  %v1572 = vand.u32 %v832, 4294901760
  %1573 = vmatmul.mubr.f32.gmra.mrb[0].mxu0 %v1572
  %v1574 = vpop.f32.mrb[0].mxu0
  %v1575 = vadd.f32 %v1461, %v1574
  %v1576 = vpop.f32.mrb[0].mxu0
  %1577 = vmatprep.mubr.f32.mxu0 0.0
  %v1578 = vand.u32 %v835, 4294901760
  %1579 = vmatmul.mubr.f32.gmra.mrb[0].mxu0 %v1578
  %v1580 = vpop.f32.mrb[0].mxu0
  %v1581 = vadd.f32 %v1467, %v1580
  %v1582 = vpop.f32.mrb[0].mxu0
  %1583 = vmatprep.mubr.f32.mxu0 0.0
  %v1584 = vand.u32 %v838, 4294901760
  %1585 = vmatmul.mubr.f32.gmra.mrb[0].mxu0 %v1584
  %v1586 = vpop.f32.mrb[0].mxu0
  %v1587 = vadd.f32 %v1473, %v1586
  %v1588 = vpop.f32.mrb[0].mxu0
  %1589 = vdwg.mxu0
  %s1590 = scalar_lea.vmem %s0, 128
  %v1591 = vld [vmem:[%s1590] sm:$0xff]
  %v1592 = vld [vmem:[%s1590 + $0x8] sm:$0xff]
  %v1593 = vld [vmem:[%s1590 + $0x10] sm:$0xff]
  %v1594 = vld [vmem:[%s1590 + $0x18] sm:$0xff]
  %v1595 = vld [vmem:[%s1590 + $0x20] sm:$0xff]
  %v1596 = vld [vmem:[%s1590 + $0x28] sm:$0xff]
  %v1597 = vld [vmem:[%s1590 + $0x30] sm:$0xff]
  %v1598 = vld [vmem:[%s1590 + $0x38] sm:$0xff]
  %s1599 = scalar_lea.vmem %s1, 8
  %v1600 = vld [vmem:[%s1599] sm:$0xf]
  %v1602 = vsel %vm40, %v1591, 0
  %v1605 = vsel %vm40, %v1592, 0
  %v1608 = vsel %vm40, %v1593, 0
  %v1611 = vsel %vm40, %v1594, 0
  %v1614 = vsel %vm40, %v1595, 0
  %v1617 = vsel %vm40, %v1596, 0
  %v1620 = vsel %vm40, %v1597, 0
  %v1623 = vsel %vm40, %v1598, 0
  %v1626 = vsel %vm65, %v1600, 0
  %1628 = vmatprep.subr.mxu0 0.0
  %v1629 = vand.u32 %v1626, 4294901760
  %1630 = vmatpush1.msra.mxu0 %v1629
  %1631 = vmatprep.subr.mxu0 0.0
  %1632 = vmatpush1.msra.mxu0 0.0
  %1633 = vmatprep.subr.mxu0 0.0
  %1634 = vmatpush1.msra.mxu0 0.0
  %1635 = vmatprep.subr.mxu0 0.0
  %1636 = vmatpush1.msra.mxu0 0.0
  %1637 = vmatprep.subr.mxu0 0.0
  %1638 = vmatpush1.msra.mxu0 0.0
  %1639 = vmatprep.subr.mxu0 0.0
  %1640 = vmatpush1.msra.mxu0 0.0
  %1641 = vmatprep.subr.mxu0 0.0
  %1642 = vmatpush1.msra.mxu0 0.0
  %1643 = vmatprep.subr.mxu0 0.0
  %1644 = vmatpush1.msra.mxu0 0.0
  %1645 = vmatprep.subr.mxu0 0.0
  %1646 = vmatpush1.msra.mxu0 0.0
  %1647 = vmatprep.subr.mxu0 0.0
  %1648 = vmatpush1.msra.mxu0 0.0
  %1649 = vmatprep.subr.mxu0 0.0
  %1650 = vmatpush1.msra.mxu0 0.0
  %1651 = vmatprep.subr.mxu0 0.0
  %1652 = vmatpush1.msra.mxu0 0.0
  %1653 = vmatprep.subr.mxu0 0.0
  %1654 = vmatpush1.msra.mxu0 0.0
  %1655 = vmatprep.subr.mxu0 0.0
  %1656 = vmatpush1.msra.mxu0 0.0
  %1657 = vmatprep.subr.mxu0 0.0
  %1658 = vmatpush1.msra.mxu0 0.0
  %1659 = vmatprep.subr.mxu0 0.0
  %1660 = vmatpush1.msra.mxu0 0.0
  %1661 = vmatprep.subr.mxu0 0.0
  %1662 = vmatpush1.msra.mxu0 0.0
  %1663 = vmatprep.subr.mxu0 0.0
  %1664 = vmatpush1.msra.mxu0 0.0
  %1665 = vmatprep.subr.mxu0 0.0
  %1666 = vmatpush1.msra.mxu0 0.0
  %1667 = vmatprep.subr.mxu0 0.0
  %1668 = vmatpush1.msra.mxu0 0.0
  %1669 = vmatprep.subr.mxu0 0.0
  %1670 = vmatpush1.msra.mxu0 0.0
  %1671 = vmatprep.subr.mxu0 0.0
  %1672 = vmatpush1.msra.mxu0 0.0
  %1673 = vmatprep.subr.mxu0 0.0
  %1674 = vmatpush1.msra.mxu0 0.0
  %1675 = vmatprep.subr.mxu0 0.0
  %1676 = vmatpush1.msra.mxu0 0.0
  %1677 = vmatprep.subr.mxu0 0.0
  %1678 = vmatpush1.msra.mxu0 0.0
  %1679 = vmatprep.subr.mxu0 0.0
  %1680 = vmatpush1.msra.mxu0 0.0
  %1681 = vmatprep.subr.mxu0 0.0
  %1682 = vmatpush1.msra.mxu0 0.0
  %1683 = vmatprep.subr.mxu0 0.0
  %1684 = vmatpush1.msra.mxu0 0.0
  %1685 = vmatprep.subr.mxu0 0.0
  %1686 = vmatpush1.msra.mxu0 0.0
  %1687 = vmatprep.subr.mxu0 0.0
  %1688 = vmatpush1.msra.mxu0 0.0
  %1689 = vmatprep.subr.mxu0 0.0
  %1690 = vmatpush1.msra.mxu0 0.0
  %1691 = vmatprep.subr.mxu0 0.0
  %1692 = vmatpush1.msra.mxu0 0.0
  %1693 = vmatprep.mubr.f32.mxu0 0.0
  %v1694 = vand.u32 %v1602, 4294901760
  %v1695 = vsub.f32 %v1602, %v1694
  %v1696 = vand.u32 %v1695, 4294901760
  %v1697 = vsub.f32 %v1695, %v1696
  %v1698 = vand.u32 %v1697, 4294901760
  %1699 = vmatmul.mubr.f32.gmra.mrb[0].mxu0 %v1698
  %v1700 = vpop.f32.mrb[0].mxu0
  %v1701 = vadd.f32 0.0, %v1700
  %v1702 = vpop.f32.mrb[0].mxu0
  %1703 = vmatprep.mubr.f32.mxu0 0.0
  %v1704 = vand.u32 %v1605, 4294901760
  %v1705 = vsub.f32 %v1605, %v1704
  %v1706 = vand.u32 %v1705, 4294901760
  %v1707 = vsub.f32 %v1705, %v1706
  %v1708 = vand.u32 %v1707, 4294901760
  %1709 = vmatmul.mubr.f32.gmra.mrb[0].mxu0 %v1708
  %v1710 = vpop.f32.mrb[0].mxu0
  %v1711 = vadd.f32 0.0, %v1710
  %v1712 = vpop.f32.mrb[0].mxu0
  %1713 = vmatprep.mubr.f32.mxu0 0.0
  %v1714 = vand.u32 %v1608, 4294901760
  %v1715 = vsub.f32 %v1608, %v1714
  %v1716 = vand.u32 %v1715, 4294901760
  %v1717 = vsub.f32 %v1715, %v1716
  %v1718 = vand.u32 %v1717, 4294901760
  %1719 = vmatmul.mubr.f32.gmra.mrb[0].mxu0 %v1718
  %v1720 = vpop.f32.mrb[0].mxu0
  %v1721 = vadd.f32 0.0, %v1720
  %v1722 = vpop.f32.mrb[0].mxu0
  %1723 = vmatprep.mubr.f32.mxu0 0.0
  %v1724 = vand.u32 %v1611, 4294901760
  %v1725 = vsub.f32 %v1611, %v1724
  %v1726 = vand.u32 %v1725, 4294901760
  %v1727 = vsub.f32 %v1725, %v1726
  %v1728 = vand.u32 %v1727, 4294901760
  %1729 = vmatmul.mubr.f32.gmra.mrb[0].mxu0 %v1728
  %v1730 = vpop.f32.mrb[0].mxu0
  %v1731 = vadd.f32 0.0, %v1730
  %v1732 = vpop.f32.mrb[0].mxu0
  %1733 = vmatprep.mubr.f32.mxu0 0.0
  %v1734 = vand.u32 %v1614, 4294901760
  %v1735 = vsub.f32 %v1614, %v1734
  %v1736 = vand.u32 %v1735, 4294901760
  %v1737 = vsub.f32 %v1735, %v1736
  %v1738 = vand.u32 %v1737, 4294901760
  %1739 = vmatmul.mubr.f32.gmra.mrb[0].mxu0 %v1738
  %v1740 = vpop.f32.mrb[0].mxu0
  %v1741 = vadd.f32 0.0, %v1740
  %v1742 = vpop.f32.mrb[0].mxu0
  %1743 = vmatprep.mubr.f32.mxu0 0.0
  %v1744 = vand.u32 %v1617, 4294901760
  %v1745 = vsub.f32 %v1617, %v1744
  %v1746 = vand.u32 %v1745, 4294901760
  %v1747 = vsub.f32 %v1745, %v1746
  %v1748 = vand.u32 %v1747, 4294901760
  %1749 = vmatmul.mubr.f32.gmra.mrb[0].mxu0 %v1748
  %v1750 = vpop.f32.mrb[0].mxu0
  %v1751 = vadd.f32 0.0, %v1750
  %v1752 = vpop.f32.mrb[0].mxu0
  %1753 = vmatprep.mubr.f32.mxu0 0.0
  %v1754 = vand.u32 %v1620, 4294901760
  %v1755 = vsub.f32 %v1620, %v1754
  %v1756 = vand.u32 %v1755, 4294901760
  %v1757 = vsub.f32 %v1755, %v1756
  %v1758 = vand.u32 %v1757, 4294901760
  %1759 = vmatmul.mubr.f32.gmra.mrb[0].mxu0 %v1758
  %v1760 = vpop.f32.mrb[0].mxu0
  %v1761 = vadd.f32 0.0, %v1760
  %v1762 = vpop.f32.mrb[0].mxu0
  %1763 = vmatprep.mubr.f32.mxu0 0.0
  %v1764 = vand.u32 %v1623, 4294901760
  %v1765 = vsub.f32 %v1623, %v1764
  %v1766 = vand.u32 %v1765, 4294901760
  %v1767 = vsub.f32 %v1765, %v1766
  %v1768 = vand.u32 %v1767, 4294901760
  %1769 = vmatmul.mubr.f32.gmra.mrb[0].mxu0 %v1768
  %v1770 = vpop.f32.mrb[0].mxu0
  %v1771 = vadd.f32 0.0, %v1770
  %v1772 = vpop.f32.mrb[0].mxu0
  %1773 = vdwg.mxu0
  %1774 = vmatprep.subr.mxu0 0.0
  %v1775 = vand.u32 %v1626, 4294901760
  %v1776 = vsub.f32 %v1626, %v1775
  %v1777 = vand.u32 %v1776, 4294901760
  %v1778 = vsub.f32 %v1776, %v1777
  %v1779 = vand.u32 %v1778, 4294901760
  %1780 = vmatpush1.msra.mxu0 %v1779
  %1781 = vmatprep.subr.mxu0 0.0
  %1782 = vmatpush1.msra.mxu0 0.0
  %1783 = vmatprep.subr.mxu0 0.0
  %1784 = vmatpush1.msra.mxu0 0.0
  %1785 = vmatprep.subr.mxu0 0.0
  %1786 = vmatpush1.msra.mxu0 0.0
  %1787 = vmatprep.subr.mxu0 0.0
  %1788 = vmatpush1.msra.mxu0 0.0
  %1789 = vmatprep.subr.mxu0 0.0
  %1790 = vmatpush1.msra.mxu0 0.0
  %1791 = vmatprep.subr.mxu0 0.0
  %1792 = vmatpush1.msra.mxu0 0.0
  %1793 = vmatprep.subr.mxu0 0.0
  %1794 = vmatpush1.msra.mxu0 0.0
  %1795 = vmatprep.subr.mxu0 0.0
  %1796 = vmatpush1.msra.mxu0 0.0
  %1797 = vmatprep.subr.mxu0 0.0
  %1798 = vmatpush1.msra.mxu0 0.0
  %1799 = vmatprep.subr.mxu0 0.0
  %1800 = vmatpush1.msra.mxu0 0.0
  %1801 = vmatprep.subr.mxu0 0.0
  %1802 = vmatpush1.msra.mxu0 0.0
  %1803 = vmatprep.subr.mxu0 0.0
  %1804 = vmatpush1.msra.mxu0 0.0
  %1805 = vmatprep.subr.mxu0 0.0
  %1806 = vmatpush1.msra.mxu0 0.0
  %1807 = vmatprep.subr.mxu0 0.0
  %1808 = vmatpush1.msra.mxu0 0.0
  %1809 = vmatprep.subr.mxu0 0.0
  %1810 = vmatpush1.msra.mxu0 0.0
  %1811 = vmatprep.subr.mxu0 0.0
  %1812 = vmatpush1.msra.mxu0 0.0
  %1813 = vmatprep.subr.mxu0 0.0
  %1814 = vmatpush1.msra.mxu0 0.0
  %1815 = vmatprep.subr.mxu0 0.0
  %1816 = vmatpush1.msra.mxu0 0.0
  %1817 = vmatprep.subr.mxu0 0.0
  %1818 = vmatpush1.msra.mxu0 0.0
  %1819 = vmatprep.subr.mxu0 0.0
  %1820 = vmatpush1.msra.mxu0 0.0
  %1821 = vmatprep.subr.mxu0 0.0
  %1822 = vmatpush1.msra.mxu0 0.0
  %1823 = vmatprep.subr.mxu0 0.0
  %1824 = vmatpush1.msra.mxu0 0.0
  %1825 = vmatprep.subr.mxu0 0.0
  %1826 = vmatpush1.msra.mxu0 0.0
  %1827 = vmatprep.subr.mxu0 0.0
  %1828 = vmatpush1.msra.mxu0 0.0
  %1829 = vmatprep.subr.mxu0 0.0
  %1830 = vmatpush1.msra.mxu0 0.0
  %1831 = vmatprep.subr.mxu0 0.0
  %1832 = vmatpush1.msra.mxu0 0.0
  %1833 = vmatprep.subr.mxu0 0.0
  %1834 = vmatpush1.msra.mxu0 0.0
  %1835 = vmatprep.subr.mxu0 0.0
  %1836 = vmatpush1.msra.mxu0 0.0
  %1837 = vmatprep.subr.mxu0 0.0
  %1838 = vmatpush1.msra.mxu0 0.0
  %1839 = vmatprep.subr.mxu0 0.0
  %1840 = vmatpush1.msra.mxu0 0.0
  %1841 = vmatprep.subr.mxu0 0.0
  %1842 = vmatpush1.msra.mxu0 0.0
  %1843 = vmatprep.mubr.f32.mxu0 0.0
  %v1844 = vand.u32 %v1602, 4294901760
  %1845 = vmatmul.mubr.f32.gmra.mrb[0].mxu0 %v1844
  %v1846 = vpop.f32.mrb[0].mxu0
  %v1847 = vadd.f32 %v1701, %v1846
  %v1848 = vpop.f32.mrb[0].mxu0
  %1849 = vmatprep.mubr.f32.mxu0 0.0
  %v1850 = vand.u32 %v1605, 4294901760
  %1851 = vmatmul.mubr.f32.gmra.mrb[0].mxu0 %v1850
  %v1852 = vpop.f32.mrb[0].mxu0
  %v1853 = vadd.f32 %v1711, %v1852
  %v1854 = vpop.f32.mrb[0].mxu0
  %1855 = vmatprep.mubr.f32.mxu0 0.0
  %v1856 = vand.u32 %v1608, 4294901760
  %1857 = vmatmul.mubr.f32.gmra.mrb[0].mxu0 %v1856
  %v1858 = vpop.f32.mrb[0].mxu0
  %v1859 = vadd.f32 %v1721, %v1858
  %v1860 = vpop.f32.mrb[0].mxu0
  %1861 = vmatprep.mubr.f32.mxu0 0.0
  %v1862 = vand.u32 %v1611, 4294901760
  %1863 = vmatmul.mubr.f32.gmra.mrb[0].mxu0 %v1862
  %v1864 = vpop.f32.mrb[0].mxu0
  %v1865 = vadd.f32 %v1731, %v1864
  %v1866 = vpop.f32.mrb[0].mxu0
  %1867 = vmatprep.mubr.f32.mxu0 0.0
  %v1868 = vand.u32 %v1614, 4294901760
  %1869 = vmatmul.mubr.f32.gmra.mrb[0].mxu0 %v1868
  %v1870 = vpop.f32.mrb[0].mxu0
  %v1871 = vadd.f32 %v1741, %v1870
  %v1872 = vpop.f32.mrb[0].mxu0
  %1873 = vmatprep.mubr.f32.mxu0 0.0
  %v1874 = vand.u32 %v1617, 4294901760
  %1875 = vmatmul.mubr.f32.gmra.mrb[0].mxu0 %v1874
  %v1876 = vpop.f32.mrb[0].mxu0
  %v1877 = vadd.f32 %v1751, %v1876
  %v1878 = vpop.f32.mrb[0].mxu0
  %1879 = vmatprep.mubr.f32.mxu0 0.0
  %v1880 = vand.u32 %v1620, 4294901760
  %1881 = vmatmul.mubr.f32.gmra.mrb[0].mxu0 %v1880
  %v1882 = vpop.f32.mrb[0].mxu0
  %v1883 = vadd.f32 %v1761, %v1882
  %v1884 = vpop.f32.mrb[0].mxu0
  %1885 = vmatprep.mubr.f32.mxu0 0.0
  %v1886 = vand.u32 %v1623, 4294901760
  %1887 = vmatmul.mubr.f32.gmra.mrb[0].mxu0 %v1886
  %v1888 = vpop.f32.mrb[0].mxu0
  %v1889 = vadd.f32 %v1771, %v1888
  %v1890 = vpop.f32.mrb[0].mxu0
  %1891 = vdwg.mxu0
  %1892 = vmatprep.subr.mxu0 0.0
  %v1893 = vand.u32 %v1626, 4294901760
  %v1894 = vsub.f32 %v1626, %v1893
  %1895 = vmatpush1.msra.mxu0 %v1894
  %1896 = vmatprep.subr.mxu0 0.0
  %1897 = vmatpush1.msra.mxu0 0.0
  %1898 = vmatprep.subr.mxu0 0.0
  %1899 = vmatpush1.msra.mxu0 0.0
  %1900 = vmatprep.subr.mxu0 0.0
  %1901 = vmatpush1.msra.mxu0 0.0
  %1902 = vmatprep.subr.mxu0 0.0
  %1903 = vmatpush1.msra.mxu0 0.0
  %1904 = vmatprep.subr.mxu0 0.0
  %1905 = vmatpush1.msra.mxu0 0.0
  %1906 = vmatprep.subr.mxu0 0.0
  %1907 = vmatpush1.msra.mxu0 0.0
  %1908 = vmatprep.subr.mxu0 0.0
  %1909 = vmatpush1.msra.mxu0 0.0
  %1910 = vmatprep.subr.mxu0 0.0
  %1911 = vmatpush1.msra.mxu0 0.0
  %1912 = vmatprep.subr.mxu0 0.0
  %1913 = vmatpush1.msra.mxu0 0.0
  %1914 = vmatprep.subr.mxu0 0.0
  %1915 = vmatpush1.msra.mxu0 0.0
  %1916 = vmatprep.subr.mxu0 0.0
  %1917 = vmatpush1.msra.mxu0 0.0
  %1918 = vmatprep.subr.mxu0 0.0
  %1919 = vmatpush1.msra.mxu0 0.0
  %1920 = vmatprep.subr.mxu0 0.0
  %1921 = vmatpush1.msra.mxu0 0.0
  %1922 = vmatprep.subr.mxu0 0.0
  %1923 = vmatpush1.msra.mxu0 0.0
  %1924 = vmatprep.subr.mxu0 0.0
  %1925 = vmatpush1.msra.mxu0 0.0
  %1926 = vmatprep.subr.mxu0 0.0
  %1927 = vmatpush1.msra.mxu0 0.0
  %1928 = vmatprep.subr.mxu0 0.0
  %1929 = vmatpush1.msra.mxu0 0.0
  %1930 = vmatprep.subr.mxu0 0.0
  %1931 = vmatpush1.msra.mxu0 0.0
  %1932 = vmatprep.subr.mxu0 0.0
  %1933 = vmatpush1.msra.mxu0 0.0
  %1934 = vmatprep.subr.mxu0 0.0
  %1935 = vmatpush1.msra.mxu0 0.0
  %1936 = vmatprep.subr.mxu0 0.0
  %1937 = vmatpush1.msra.mxu0 0.0
  %1938 = vmatprep.subr.mxu0 0.0
  %1939 = vmatpush1.msra.mxu0 0.0
  %1940 = vmatprep.subr.mxu0 0.0
  %1941 = vmatpush1.msra.mxu0 0.0
  %1942 = vmatprep.subr.mxu0 0.0
  %1943 = vmatpush1.msra.mxu0 0.0
  %1944 = vmatprep.subr.mxu0 0.0
  %1945 = vmatpush1.msra.mxu0 0.0
  %1946 = vmatprep.subr.mxu0 0.0
  %1947 = vmatpush1.msra.mxu0 0.0
  %1948 = vmatprep.subr.mxu0 0.0
  %1949 = vmatpush1.msra.mxu0 0.0
  %1950 = vmatprep.subr.mxu0 0.0
  %1951 = vmatpush1.msra.mxu0 0.0
  %1952 = vmatprep.subr.mxu0 0.0
  %1953 = vmatpush1.msra.mxu0 0.0
  %1954 = vmatprep.subr.mxu0 0.0
  %1955 = vmatpush1.msra.mxu0 0.0
  %1956 = vmatprep.subr.mxu0 0.0
  %1957 = vmatpush1.msra.mxu0 0.0
  %1958 = vmatprep.mubr.f32.mxu0 0.0
  %v1959 = vand.u32 %v1602, 4294901760
  %v1960 = vsub.f32 %v1602, %v1959
  %1961 = vmatmul.mubr.f32.gmra.mrb[0].mxu0 %v1960
  %v1962 = vpop.f32.mrb[0].mxu0
  %v1963 = vadd.f32 %v1847, %v1962
  %v1964 = vpop.f32.mrb[0].mxu0
  %1965 = vmatprep.mubr.f32.mxu0 0.0
  %v1966 = vand.u32 %v1605, 4294901760
  %v1967 = vsub.f32 %v1605, %v1966
  %1968 = vmatmul.mubr.f32.gmra.mrb[0].mxu0 %v1967
  %v1969 = vpop.f32.mrb[0].mxu0
  %v1970 = vadd.f32 %v1853, %v1969
  %v1971 = vpop.f32.mrb[0].mxu0
  %1972 = vmatprep.mubr.f32.mxu0 0.0
  %v1973 = vand.u32 %v1608, 4294901760
  %v1974 = vsub.f32 %v1608, %v1973
  %1975 = vmatmul.mubr.f32.gmra.mrb[0].mxu0 %v1974
  %v1976 = vpop.f32.mrb[0].mxu0
  %v1977 = vadd.f32 %v1859, %v1976
  %v1978 = vpop.f32.mrb[0].mxu0
  %1979 = vmatprep.mubr.f32.mxu0 0.0
  %v1980 = vand.u32 %v1611, 4294901760
  %v1981 = vsub.f32 %v1611, %v1980
  %1982 = vmatmul.mubr.f32.gmra.mrb[0].mxu0 %v1981
  %v1983 = vpop.f32.mrb[0].mxu0
  %v1984 = vadd.f32 %v1865, %v1983
  %v1985 = vpop.f32.mrb[0].mxu0
  %1986 = vmatprep.mubr.f32.mxu0 0.0
  %v1987 = vand.u32 %v1614, 4294901760
  %v1988 = vsub.f32 %v1614, %v1987
  %1989 = vmatmul.mubr.f32.gmra.mrb[0].mxu0 %v1988
  %v1990 = vpop.f32.mrb[0].mxu0
  %v1991 = vadd.f32 %v1871, %v1990
  %v1992 = vpop.f32.mrb[0].mxu0
  %1993 = vmatprep.mubr.f32.mxu0 0.0
  %v1994 = vand.u32 %v1617, 4294901760
  %v1995 = vsub.f32 %v1617, %v1994
  %1996 = vmatmul.mubr.f32.gmra.mrb[0].mxu0 %v1995
  %v1997 = vpop.f32.mrb[0].mxu0
  %v1998 = vadd.f32 %v1877, %v1997
  %v1999 = vpop.f32.mrb[0].mxu0
  %2000 = vmatprep.mubr.f32.mxu0 0.0
  %v2001 = vand.u32 %v1620, 4294901760
  %v2002 = vsub.f32 %v1620, %v2001
  %2003 = vmatmul.mubr.f32.gmra.mrb[0].mxu0 %v2002
  %v2004 = vpop.f32.mrb[0].mxu0
  %v2005 = vadd.f32 %v1883, %v2004
  %v2006 = vpop.f32.mrb[0].mxu0
  %2007 = vmatprep.mubr.f32.mxu0 0.0
  %v2008 = vand.u32 %v1623, 4294901760
  %v2009 = vsub.f32 %v1623, %v2008
  %2010 = vmatmul.mubr.f32.gmra.mrb[0].mxu0 %v2009
  %v2011 = vpop.f32.mrb[0].mxu0
  %v2012 = vadd.f32 %v1889, %v2011
  %v2013 = vpop.f32.mrb[0].mxu0
  %2014 = vdwg.mxu0
  %2015 = vmatprep.subr.mxu0 0.0
  %v2016 = vand.u32 %v1626, 4294901760
  %2017 = vmatpush1.msra.mxu0 %v2016
  %2018 = vmatprep.subr.mxu0 0.0
  %2019 = vmatpush1.msra.mxu0 0.0
  %2020 = vmatprep.subr.mxu0 0.0
  %2021 = vmatpush1.msra.mxu0 0.0
  %2022 = vmatprep.subr.mxu0 0.0
  %2023 = vmatpush1.msra.mxu0 0.0
  %2024 = vmatprep.subr.mxu0 0.0
  %2025 = vmatpush1.msra.mxu0 0.0
  %2026 = vmatprep.subr.mxu0 0.0
  %2027 = vmatpush1.msra.mxu0 0.0
  %2028 = vmatprep.subr.mxu0 0.0
  %2029 = vmatpush1.msra.mxu0 0.0
  %2030 = vmatprep.subr.mxu0 0.0
  %2031 = vmatpush1.msra.mxu0 0.0
  %2032 = vmatprep.subr.mxu0 0.0
  %2033 = vmatpush1.msra.mxu0 0.0
  %2034 = vmatprep.subr.mxu0 0.0
  %2035 = vmatpush1.msra.mxu0 0.0
  %2036 = vmatprep.subr.mxu0 0.0
  %2037 = vmatpush1.msra.mxu0 0.0
  %2038 = vmatprep.subr.mxu0 0.0
  %2039 = vmatpush1.msra.mxu0 0.0
  %2040 = vmatprep.subr.mxu0 0.0
  %2041 = vmatpush1.msra.mxu0 0.0
  %2042 = vmatprep.subr.mxu0 0.0
  %2043 = vmatpush1.msra.mxu0 0.0
  %2044 = vmatprep.subr.mxu0 0.0
  %2045 = vmatpush1.msra.mxu0 0.0
  %2046 = vmatprep.subr.mxu0 0.0
  %2047 = vmatpush1.msra.mxu0 0.0
  %2048 = vmatprep.subr.mxu0 0.0
  %2049 = vmatpush1.msra.mxu0 0.0
  %2050 = vmatprep.subr.mxu0 0.0
  %2051 = vmatpush1.msra.mxu0 0.0
  %2052 = vmatprep.subr.mxu0 0.0
  %2053 = vmatpush1.msra.mxu0 0.0
  %2054 = vmatprep.subr.mxu0 0.0
  %2055 = vmatpush1.msra.mxu0 0.0
  %2056 = vmatprep.subr.mxu0 0.0
  %2057 = vmatpush1.msra.mxu0 0.0
  %2058 = vmatprep.subr.mxu0 0.0
  %2059 = vmatpush1.msra.mxu0 0.0
  %2060 = vmatprep.subr.mxu0 0.0
  %2061 = vmatpush1.msra.mxu0 0.0
  %2062 = vmatprep.subr.mxu0 0.0
  %2063 = vmatpush1.msra.mxu0 0.0
  %2064 = vmatprep.subr.mxu0 0.0
  %2065 = vmatpush1.msra.mxu0 0.0
  %2066 = vmatprep.subr.mxu0 0.0
  %2067 = vmatpush1.msra.mxu0 0.0
  %2068 = vmatprep.subr.mxu0 0.0
  %2069 = vmatpush1.msra.mxu0 0.0
  %2070 = vmatprep.subr.mxu0 0.0
  %2071 = vmatpush1.msra.mxu0 0.0
  %2072 = vmatprep.subr.mxu0 0.0
  %2073 = vmatpush1.msra.mxu0 0.0
  %2074 = vmatprep.subr.mxu0 0.0
  %2075 = vmatpush1.msra.mxu0 0.0
  %2076 = vmatprep.subr.mxu0 0.0
  %2077 = vmatpush1.msra.mxu0 0.0
  %2078 = vmatprep.subr.mxu0 0.0
  %2079 = vmatpush1.msra.mxu0 0.0
  %2080 = vmatprep.mubr.f32.mxu0 0.0
  %v2081 = vand.u32 %v1602, 4294901760
  %v2082 = vsub.f32 %v1602, %v2081
  %v2083 = vand.u32 %v2082, 4294901760
  %2084 = vmatmul.mubr.f32.gmra.mrb[0].mxu0 %v2083
  %v2085 = vpop.f32.mrb[0].mxu0
  %v2086 = vadd.f32 %v1963, %v2085
  %v2087 = vpop.f32.mrb[0].mxu0
  %2088 = vmatprep.mubr.f32.mxu0 0.0
  %v2089 = vand.u32 %v1605, 4294901760
  %v2090 = vsub.f32 %v1605, %v2089
  %v2091 = vand.u32 %v2090, 4294901760
  %2092 = vmatmul.mubr.f32.gmra.mrb[0].mxu0 %v2091
  %v2093 = vpop.f32.mrb[0].mxu0
  %v2094 = vadd.f32 %v1970, %v2093
  %v2095 = vpop.f32.mrb[0].mxu0
  %2096 = vmatprep.mubr.f32.mxu0 0.0
  %v2097 = vand.u32 %v1608, 4294901760
  %v2098 = vsub.f32 %v1608, %v2097
  %v2099 = vand.u32 %v2098, 4294901760
  %2100 = vmatmul.mubr.f32.gmra.mrb[0].mxu0 %v2099
  %v2101 = vpop.f32.mrb[0].mxu0
  %v2102 = vadd.f32 %v1977, %v2101
  %v2103 = vpop.f32.mrb[0].mxu0
  %2104 = vmatprep.mubr.f32.mxu0 0.0
  %v2105 = vand.u32 %v1611, 4294901760
  %v2106 = vsub.f32 %v1611, %v2105
  %v2107 = vand.u32 %v2106, 4294901760
  %2108 = vmatmul.mubr.f32.gmra.mrb[0].mxu0 %v2107
  %v2109 = vpop.f32.mrb[0].mxu0
  %v2110 = vadd.f32 %v1984, %v2109
  %v2111 = vpop.f32.mrb[0].mxu0
  %2112 = vmatprep.mubr.f32.mxu0 0.0
  %v2113 = vand.u32 %v1614, 4294901760
  %v2114 = vsub.f32 %v1614, %v2113
  %v2115 = vand.u32 %v2114, 4294901760
  %2116 = vmatmul.mubr.f32.gmra.mrb[0].mxu0 %v2115
  %v2117 = vpop.f32.mrb[0].mxu0
  %v2118 = vadd.f32 %v1991, %v2117
  %v2119 = vpop.f32.mrb[0].mxu0
  %2120 = vmatprep.mubr.f32.mxu0 0.0
  %v2121 = vand.u32 %v1617, 4294901760
  %v2122 = vsub.f32 %v1617, %v2121
  %v2123 = vand.u32 %v2122, 4294901760
  %2124 = vmatmul.mubr.f32.gmra.mrb[0].mxu0 %v2123
  %v2125 = vpop.f32.mrb[0].mxu0
  %v2126 = vadd.f32 %v1998, %v2125
  %v2127 = vpop.f32.mrb[0].mxu0
  %2128 = vmatprep.mubr.f32.mxu0 0.0
  %v2129 = vand.u32 %v1620, 4294901760
  %v2130 = vsub.f32 %v1620, %v2129
  %v2131 = vand.u32 %v2130, 4294901760
  %2132 = vmatmul.mubr.f32.gmra.mrb[0].mxu0 %v2131
  %v2133 = vpop.f32.mrb[0].mxu0
  %v2134 = vadd.f32 %v2005, %v2133
  %v2135 = vpop.f32.mrb[0].mxu0
  %2136 = vmatprep.mubr.f32.mxu0 0.0
  %v2137 = vand.u32 %v1623, 4294901760
  %v2138 = vsub.f32 %v1623, %v2137
  %v2139 = vand.u32 %v2138, 4294901760
  %2140 = vmatmul.mubr.f32.gmra.mrb[0].mxu0 %v2139
  %v2141 = vpop.f32.mrb[0].mxu0
  %v2142 = vadd.f32 %v2012, %v2141
  %v2143 = vpop.f32.mrb[0].mxu0
  %2144 = vdwg.mxu0
  %2145 = vmatprep.subr.mxu0 0.0
  %v2146 = vand.u32 %v1626, 4294901760
  %v2147 = vsub.f32 %v1626, %v2146
  %v2148 = vand.u32 %v2147, 4294901760
  %2149 = vmatpush1.msra.mxu0 %v2148
  %2150 = vmatprep.subr.mxu0 0.0
  %2151 = vmatpush1.msra.mxu0 0.0
  %2152 = vmatprep.subr.mxu0 0.0
  %2153 = vmatpush1.msra.mxu0 0.0
  %2154 = vmatprep.subr.mxu0 0.0
  %2155 = vmatpush1.msra.mxu0 0.0
  %2156 = vmatprep.subr.mxu0 0.0
  %2157 = vmatpush1.msra.mxu0 0.0
  %2158 = vmatprep.subr.mxu0 0.0
  %2159 = vmatpush1.msra.mxu0 0.0
  %2160 = vmatprep.subr.mxu0 0.0
  %2161 = vmatpush1.msra.mxu0 0.0
  %2162 = vmatprep.subr.mxu0 0.0
  %2163 = vmatpush1.msra.mxu0 0.0
  %2164 = vmatprep.subr.mxu0 0.0
  %2165 = vmatpush1.msra.mxu0 0.0
  %2166 = vmatprep.subr.mxu0 0.0
  %2167 = vmatpush1.msra.mxu0 0.0
  %2168 = vmatprep.subr.mxu0 0.0
  %2169 = vmatpush1.msra.mxu0 0.0
  %2170 = vmatprep.subr.mxu0 0.0
  %2171 = vmatpush1.msra.mxu0 0.0
  %2172 = vmatprep.subr.mxu0 0.0
  %2173 = vmatpush1.msra.mxu0 0.0
  %2174 = vmatprep.subr.mxu0 0.0
  %2175 = vmatpush1.msra.mxu0 0.0
  %2176 = vmatprep.subr.mxu0 0.0
  %2177 = vmatpush1.msra.mxu0 0.0
  %2178 = vmatprep.subr.mxu0 0.0
  %2179 = vmatpush1.msra.mxu0 0.0
  %2180 = vmatprep.subr.mxu0 0.0
  %2181 = vmatpush1.msra.mxu0 0.0
  %2182 = vmatprep.subr.mxu0 0.0
  %2183 = vmatpush1.msra.mxu0 0.0
  %2184 = vmatprep.subr.mxu0 0.0
  %2185 = vmatpush1.msra.mxu0 0.0
  %2186 = vmatprep.subr.mxu0 0.0
  %2187 = vmatpush1.msra.mxu0 0.0
  %2188 = vmatprep.subr.mxu0 0.0
  %2189 = vmatpush1.msra.mxu0 0.0
  %2190 = vmatprep.subr.mxu0 0.0
  %2191 = vmatpush1.msra.mxu0 0.0
  %2192 = vmatprep.subr.mxu0 0.0
  %2193 = vmatpush1.msra.mxu0 0.0
  %2194 = vmatprep.subr.mxu0 0.0
  %2195 = vmatpush1.msra.mxu0 0.0
  %2196 = vmatprep.subr.mxu0 0.0
  %2197 = vmatpush1.msra.mxu0 0.0
  %2198 = vmatprep.subr.mxu0 0.0
  %2199 = vmatpush1.msra.mxu0 0.0
  %2200 = vmatprep.subr.mxu0 0.0
  %2201 = vmatpush1.msra.mxu0 0.0
  %2202 = vmatprep.subr.mxu0 0.0
  %2203 = vmatpush1.msra.mxu0 0.0
  %2204 = vmatprep.subr.mxu0 0.0
  %2205 = vmatpush1.msra.mxu0 0.0
  %2206 = vmatprep.subr.mxu0 0.0
  %2207 = vmatpush1.msra.mxu0 0.0
  %2208 = vmatprep.subr.mxu0 0.0
  %2209 = vmatpush1.msra.mxu0 0.0
  %2210 = vmatprep.subr.mxu0 0.0
  %2211 = vmatpush1.msra.mxu0 0.0
  %2212 = vmatprep.mubr.f32.mxu0 0.0
  %v2213 = vand.u32 %v1602, 4294901760
  %2214 = vmatmul.mubr.f32.gmra.mrb[0].mxu0 %v2213
  %v2215 = vpop.f32.mrb[0].mxu0
  %v2216 = vadd.f32 %v2086, %v2215
  %v2217 = vpop.f32.mrb[0].mxu0
  %2218 = vmatprep.mubr.f32.mxu0 0.0
  %v2219 = vand.u32 %v1605, 4294901760
  %2220 = vmatmul.mubr.f32.gmra.mrb[0].mxu0 %v2219
  %v2221 = vpop.f32.mrb[0].mxu0
  %v2222 = vadd.f32 %v2094, %v2221
  %v2223 = vpop.f32.mrb[0].mxu0
  %2224 = vmatprep.mubr.f32.mxu0 0.0
  %v2225 = vand.u32 %v1608, 4294901760
  %2226 = vmatmul.mubr.f32.gmra.mrb[0].mxu0 %v2225
  %v2227 = vpop.f32.mrb[0].mxu0
  %v2228 = vadd.f32 %v2102, %v2227
  %v2229 = vpop.f32.mrb[0].mxu0
  %2230 = vmatprep.mubr.f32.mxu0 0.0
  %v2231 = vand.u32 %v1611, 4294901760
  %2232 = vmatmul.mubr.f32.gmra.mrb[0].mxu0 %v2231
  %v2233 = vpop.f32.mrb[0].mxu0
  %v2234 = vadd.f32 %v2110, %v2233
  %v2235 = vpop.f32.mrb[0].mxu0
  %2236 = vmatprep.mubr.f32.mxu0 0.0
  %v2237 = vand.u32 %v1614, 4294901760
  %2238 = vmatmul.mubr.f32.gmra.mrb[0].mxu0 %v2237
  %v2239 = vpop.f32.mrb[0].mxu0
  %v2240 = vadd.f32 %v2118, %v2239
  %v2241 = vpop.f32.mrb[0].mxu0
  %2242 = vmatprep.mubr.f32.mxu0 0.0
  %v2243 = vand.u32 %v1617, 4294901760
  %2244 = vmatmul.mubr.f32.gmra.mrb[0].mxu0 %v2243
  %v2245 = vpop.f32.mrb[0].mxu0
  %v2246 = vadd.f32 %v2126, %v2245
  %v2247 = vpop.f32.mrb[0].mxu0
  %2248 = vmatprep.mubr.f32.mxu0 0.0
  %v2249 = vand.u32 %v1620, 4294901760
  %2250 = vmatmul.mubr.f32.gmra.mrb[0].mxu0 %v2249
  %v2251 = vpop.f32.mrb[0].mxu0
  %v2252 = vadd.f32 %v2134, %v2251
  %v2253 = vpop.f32.mrb[0].mxu0
  %2254 = vmatprep.mubr.f32.mxu0 0.0
  %v2255 = vand.u32 %v1623, 4294901760
  %2256 = vmatmul.mubr.f32.gmra.mrb[0].mxu0 %v2255
  %v2257 = vpop.f32.mrb[0].mxu0
  %v2258 = vadd.f32 %v2142, %v2257
  %v2259 = vpop.f32.mrb[0].mxu0
  %2260 = vdwg.mxu0
  %2261 = vmatprep.subr.mxu0 0.0
  %v2262 = vand.u32 %v1626, 4294901760
  %2263 = vmatpush1.msra.mxu0 %v2262
  %2264 = vmatprep.subr.mxu0 0.0
  %2265 = vmatpush1.msra.mxu0 0.0
  %2266 = vmatprep.subr.mxu0 0.0
  %2267 = vmatpush1.msra.mxu0 0.0
  %2268 = vmatprep.subr.mxu0 0.0
  %2269 = vmatpush1.msra.mxu0 0.0
  %2270 = vmatprep.subr.mxu0 0.0
  %2271 = vmatpush1.msra.mxu0 0.0
  %2272 = vmatprep.subr.mxu0 0.0
  %2273 = vmatpush1.msra.mxu0 0.0
  %2274 = vmatprep.subr.mxu0 0.0
  %2275 = vmatpush1.msra.mxu0 0.0
  %2276 = vmatprep.subr.mxu0 0.0
  %2277 = vmatpush1.msra.mxu0 0.0
  %2278 = vmatprep.subr.mxu0 0.0
  %2279 = vmatpush1.msra.mxu0 0.0
  %2280 = vmatprep.subr.mxu0 0.0
  %2281 = vmatpush1.msra.mxu0 0.0
  %2282 = vmatprep.subr.mxu0 0.0
  %2283 = vmatpush1.msra.mxu0 0.0
  %2284 = vmatprep.subr.mxu0 0.0
  %2285 = vmatpush1.msra.mxu0 0.0
  %2286 = vmatprep.subr.mxu0 0.0
  %2287 = vmatpush1.msra.mxu0 0.0
  %2288 = vmatprep.subr.mxu0 0.0
  %2289 = vmatpush1.msra.mxu0 0.0
  %2290 = vmatprep.subr.mxu0 0.0
  %2291 = vmatpush1.msra.mxu0 0.0
  %2292 = vmatprep.subr.mxu0 0.0
  %2293 = vmatpush1.msra.mxu0 0.0
  %2294 = vmatprep.subr.mxu0 0.0
  %2295 = vmatpush1.msra.mxu0 0.0
  %2296 = vmatprep.subr.mxu0 0.0
  %2297 = vmatpush1.msra.mxu0 0.0
  %2298 = vmatprep.subr.mxu0 0.0
  %2299 = vmatpush1.msra.mxu0 0.0
  %2300 = vmatprep.subr.mxu0 0.0
  %2301 = vmatpush1.msra.mxu0 0.0
  %2302 = vmatprep.subr.mxu0 0.0
  %2303 = vmatpush1.msra.mxu0 0.0
  %2304 = vmatprep.subr.mxu0 0.0
  %2305 = vmatpush1.msra.mxu0 0.0
  %2306 = vmatprep.subr.mxu0 0.0
  %2307 = vmatpush1.msra.mxu0 0.0
  %2308 = vmatprep.subr.mxu0 0.0
  %2309 = vmatpush1.msra.mxu0 0.0
  %2310 = vmatprep.subr.mxu0 0.0
  %2311 = vmatpush1.msra.mxu0 0.0
  %2312 = vmatprep.subr.mxu0 0.0
  %2313 = vmatpush1.msra.mxu0 0.0
  %2314 = vmatprep.subr.mxu0 0.0
  %2315 = vmatpush1.msra.mxu0 0.0
  %2316 = vmatprep.subr.mxu0 0.0
  %2317 = vmatpush1.msra.mxu0 0.0
  %2318 = vmatprep.subr.mxu0 0.0
  %2319 = vmatpush1.msra.mxu0 0.0
  %2320 = vmatprep.subr.mxu0 0.0
  %2321 = vmatpush1.msra.mxu0 0.0
  %2322 = vmatprep.subr.mxu0 0.0
  %2323 = vmatpush1.msra.mxu0 0.0
  %2324 = vmatprep.subr.mxu0 0.0
  %2325 = vmatpush1.msra.mxu0 0.0
  %2326 = vmatprep.mubr.f32.mxu0 0.0
  %v2327 = vand.u32 %v1602, 4294901760
  %2328 = vmatmul.mubr.f32.gmra.mrb[0].mxu0 %v2327
  %v2329 = vpop.f32.mrb[0].mxu0
  %v2330 = vadd.f32 %v2216, %v2329
  %v2331 = vpop.f32.mrb[0].mxu0
  %2332 = vmatprep.mubr.f32.mxu0 0.0
  %v2333 = vand.u32 %v1605, 4294901760
  %2334 = vmatmul.mubr.f32.gmra.mrb[0].mxu0 %v2333
  %v2335 = vpop.f32.mrb[0].mxu0
  %v2336 = vadd.f32 %v2222, %v2335
  %v2337 = vpop.f32.mrb[0].mxu0
  %2338 = vmatprep.mubr.f32.mxu0 0.0
  %v2339 = vand.u32 %v1608, 4294901760
  %2340 = vmatmul.mubr.f32.gmra.mrb[0].mxu0 %v2339
  %v2341 = vpop.f32.mrb[0].mxu0
  %v2342 = vadd.f32 %v2228, %v2341
  %v2343 = vpop.f32.mrb[0].mxu0
  %2344 = vmatprep.mubr.f32.mxu0 0.0
  %v2345 = vand.u32 %v1611, 4294901760
  %2346 = vmatmul.mubr.f32.gmra.mrb[0].mxu0 %v2345
  %v2347 = vpop.f32.mrb[0].mxu0
  %v2348 = vadd.f32 %v2234, %v2347
  %v2349 = vpop.f32.mrb[0].mxu0
  %2350 = vmatprep.mubr.f32.mxu0 0.0
  %v2351 = vand.u32 %v1614, 4294901760
  %2352 = vmatmul.mubr.f32.gmra.mrb[0].mxu0 %v2351
  %v2353 = vpop.f32.mrb[0].mxu0
  %v2354 = vadd.f32 %v2240, %v2353
  %v2355 = vpop.f32.mrb[0].mxu0
  %2356 = vmatprep.mubr.f32.mxu0 0.0
  %v2357 = vand.u32 %v1617, 4294901760
  %2358 = vmatmul.mubr.f32.gmra.mrb[0].mxu0 %v2357
  %v2359 = vpop.f32.mrb[0].mxu0
  %v2360 = vadd.f32 %v2246, %v2359
  %v2361 = vpop.f32.mrb[0].mxu0
  %2362 = vmatprep.mubr.f32.mxu0 0.0
  %v2363 = vand.u32 %v1620, 4294901760
  %2364 = vmatmul.mubr.f32.gmra.mrb[0].mxu0 %v2363
  %v2365 = vpop.f32.mrb[0].mxu0
  %v2366 = vadd.f32 %v2252, %v2365
  %v2367 = vpop.f32.mrb[0].mxu0
  %2368 = vmatprep.mubr.f32.mxu0 0.0
  %v2369 = vand.u32 %v1623, 4294901760
  %2370 = vmatmul.mubr.f32.gmra.mrb[0].mxu0 %v2369
  %v2371 = vpop.f32.mrb[0].mxu0
  %v2372 = vadd.f32 %v2258, %v2371
  %v2373 = vpop.f32.mrb[0].mxu0
  %2374 = vdwg.mxu0
  %v2375 = vadd.f32 %v1545, %v2330
  %v2376 = vadd.f32 %v1551, %v2336
  %v2377 = vadd.f32 %v1557, %v2342
  %v2378 = vadd.f32 %v1563, %v2348
  %v2379 = vadd.f32 %v1569, %v2354
  %v2380 = vadd.f32 %v1575, %v2360
  %v2381 = vadd.f32 %v1581, %v2366
  %v2382 = vadd.f32 %v1587, %v2372
  %v2383 = vld [vmem:[%s2] sm:$0x1]
  %v2385 = vlaneseq
  %v2386 = vshrl.u32 %v2385, 7
  %v2387 = vsub.s32 0, %v2386
  %v2388 = vrot.slane %v2383, %v2387
  %v2390 = vadd.f32 %v2375, %v2388
  %v2391 = vadd.f32 %v2376, %v2388
  %v2392 = vadd.f32 %v2377, %v2388
  %v2393 = vadd.f32 %v2378, %v2388
  %v2394 = vadd.f32 %v2379, %v2388
  %v2395 = vadd.f32 %v2380, %v2388
  %v2396 = vadd.f32 %v2381, %v2388
  %v2397 = vadd.f32 %v2382, %v2388
  %v2398 = vld [vmem:[%s3] sm:$0x1]
  %v2400 = vlaneseq
  %v2401 = vshrl.u32 %v2400, 7
  %v2402 = vsub.s32 0, %v2401
  %v2403 = vrot.slane %v2398, %v2402
  %v2405 = vmul.f32 %v2390, %v2403
  %v2406 = vmul.f32 %v2391, %v2403
  %v2407 = vmul.f32 %v2392, %v2403
  %v2408 = vmul.f32 %v2393, %v2403
  %v2409 = vmul.f32 %v2394, %v2403
  %v2410 = vmul.f32 %v2395, %v2403
  %v2411 = vmul.f32 %v2396, %v2403
  %v2412 = vmul.f32 %v2397, %v2403
  %v2413 = vld [vmem:[%s4] sm:$0x1]
  %v2415 = vlaneseq
  %v2416 = vshrl.u32 %v2415, 7
  %v2417 = vsub.s32 0, %v2416
  %v2418 = vrot.slane %v2413, %v2417
  %v2420 = vadd.f32 %v2405, %v2418
  %v2421 = vadd.f32 %v2406, %v2418
  %v2422 = vadd.f32 %v2407, %v2418
  %v2423 = vadd.f32 %v2408, %v2418
  %v2424 = vadd.f32 %v2409, %v2418
  %v2425 = vadd.f32 %v2410, %v2418
  %v2426 = vadd.f32 %v2411, %v2418
  %v2427 = vadd.f32 %v2412, %v2418
  %vm2428 = vcmask 64512
  %2429 = vst.msk [vmem:[%s5] sm:$0xff] %vm2428, %v2420
  %2430 = vst.msk [vmem:[%s5 + $0x8] sm:$0xff] %vm2428, %v2421
  %2431 = vst.msk [vmem:[%s5 + $0x10] sm:$0xff] %vm2428, %v2422
  %2432 = vst.msk [vmem:[%s5 + $0x18] sm:$0xff] %vm2428, %v2423
  %2433 = vst.msk [vmem:[%s5 + $0x20] sm:$0xff] %vm2428, %v2424
  %2434 = vst.msk [vmem:[%s5 + $0x28] sm:$0xff] %vm2428, %v2425
  %2435 = vst.msk [vmem:[%s5 + $0x30] sm:$0xff] %vm2428, %v2426
  %2436 = vst.msk [vmem:[%s5 + $0x38] sm:$0xff] %vm2428, %v2427
  // Predicated region
  $region22: #{tpu_custom_call.1} parent=0 // pred_check
    _
  $region23: #{tpu_custom_call.1} parent=0 // pred_check_branch
    %2438 = sbr.rel (0) target = $region25
  $region24: #{tpu_custom_call.1} parent=0 // pred_region
    _
  $region25: #{tpu_custom_call.1} parent=0 // pred_fallthru
    _
  // Predicated region
  $region26: #{tpu_custom_call.1} parent=0 // pred_check
    _
  $region27: #{tpu_custom_call.1} parent=0 // pred_check_branch
    %2440 = sbr.rel (0) target = $region29
  $region28: #{tpu_custom_call.1} parent=0 // pred_region
    _
  $region29: #{tpu_custom_call.1} parent=0 // pred_fallthru
    _

</llo_original>
